<compile_context>
chip_gen: v5e
topology: v5e:2x2
jax: 0.10.0
libtpu: 0.0.40
codegen_flags: <defaults>
</compile_context>

<pallas_src>
import math
import functools

import jax
import jax.numpy as jnp
from jax import lax
from jax.experimental import pallas as pl
from jax.experimental.pallas import tpu as pltpu


def _layer_norm(x, gamma, beta, eps=1e-5):
    # x: (rows, D); gamma/beta: (1, D)
    mu = jnp.mean(x, axis=-1, keepdims=True)
    xc = x - mu
    var = jnp.mean(xc * xc, axis=-1, keepdims=True)
    inv = lax.rsqrt(var + eps)
    return xc * inv * gamma + beta


def encoder_layer_kernel(
    x_ref, mask_ref,
    wqkv_ref, bqkv_ref,
    wfc_ref, bfc_ref,
    w1_ref, b1_ref, w2_ref, b2_ref,
    gamma_ref, beta_ref,
    o_ref,
    ctx_ref, y_ref, acc_ref,
    *, num_heads, head_dim,
):
    fi = pl.program_id(1)
    nf = pl.num_programs(1)
    bb, T, D = x_ref.shape
    H, hd = num_heads, head_dim
    rows = bb * T

    # ---------- Attention + first residual/LayerNorm: once per batch block ----
    @pl.when(fi == 0)
    def _attention_block():
        x_bf = x_ref[...].reshape(rows, D)                            # bf16
        # Fused Q/K/V projection (1/sqrt(hd) pre-folded into Q); cast to bf16
        # once right after the bias add (single (rows, 3D) bf16 temporary).
        qkv = (jnp.dot(x_bf, wqkv_ref[...],
                       preferred_element_type=jnp.float32)
               + bqkv_ref[...]).astype(jnp.bfloat16)                  # (rows, 3D)
        mask = mask_ref[...]                                          # (T, T)

        # TODO(synk): for T >= ~1024 switch to a flash-style online softmax over
        # a kv grid axis instead of materializing the (bb, T, T) score block.
        # TODO(synk): when hd < 128, slice two heads at a time (128-lane aligned)
        # and run the loop as lax.fori_loop over head pairs.
        for h in range(H):
            lo = h * hd
            qh = qkv[:, lo:lo + hd].reshape(bb, T, hd)
            kh = qkv[:, D + lo:D + lo + hd].reshape(bb, T, hd)
            vh = qkv[:, 2 * D + lo:2 * D + lo + hd].reshape(bb, T, hd)

            # q @ k^T contracting the head dim directly (no XLU transpose),
            # batched over the batch rows held in the block.
            s = lax.dot_general(qh, kh, (((2,), (2,)), ((0,), (0,))),
                                preferred_element_type=jnp.float32)   # (bb,T,T)
            s = s + mask                              # broadcasts over bb
            s = s - jnp.max(s, axis=-1, keepdims=True)
            # TODO(synk): on v6e/v7x the exp could run in bf16 (f32 denominator);
            # kept f32 here so the same kernel is optimal on v5e.
            p = jnp.exp(s)
            denom = jnp.sum(p, axis=-1, keepdims=True)
            c = lax.dot_general(p.astype(jnp.bfloat16), vh,
                                (((2,), (1,)), ((0,), (0,))),
                                preferred_element_type=jnp.float32)   # (bb,T,hd)
            # Normalize the (T, hd) context, not the (T, T) score block.
            c = c * pl.reciprocal(denom, approx=True)
            ctx_ref[:, lo:lo + hd] = c.reshape(rows, hd).astype(jnp.bfloat16)

        # Output projection with full K = D contraction depth (one MXU pass).
        attn = jnp.dot(ctx_ref[...], wfc_ref[...],
                       preferred_element_type=jnp.float32) + bfc_ref[...]
        # Residual + LayerNorm #1 (f32); x is cast to f32 only here.
        y_ref[...] = _layer_norm(x_bf.astype(jnp.float32) + attn,
                                 gamma_ref[...], beta_ref[...])
        acc_ref[...] = jnp.zeros_like(acc_ref)

    # ---------- FFN: one (D, tf) x (tf, D) reduction tile per grid step ------
    # TODO(synk): nn.Dropout after the ReLU is modeled as identity (inference).
    y_bf = y_ref[...].astype(jnp.bfloat16)
    h1 = jnp.dot(y_bf, w1_ref[...],
                 preferred_element_type=jnp.float32) + b1_ref[...]
    h1 = jnp.maximum(h1, 0.0).astype(jnp.bfloat16)
    acc_ref[...] += jnp.dot(h1, w2_ref[...],
                            preferred_element_type=jnp.float32)

    # ---------- Second residual + LayerNorm + store: last ff tile ------------
    @pl.when(fi == nf - 1)
    def _finalize():
        h2 = acc_ref[...] + b2_ref[...]
        # Same gamma/beta for both norms: the PyTorch module reuses self.norm.
        out = _layer_norm(y_ref[...] + h2, gamma_ref[...], beta_ref[...])
        o_ref[...] = out.reshape(bb, T, D).astype(o_ref.dtype)


# --------------------------- sizing heuristics -------------------------------
def _vmem_limit_bytes():
    # Raise the scoped-VMEM limit above the 16/32 MiB defaults, keeping headroom
    # under the physical capacity (64 MiB per TC on v7x, 128 MiB on v5e/v6e).
    try:
        cap = pltpu.get_tpu_info().vmem_capacity_bytes
    except Exception:
        cap = 64 * 1024 * 1024
    return int(min(100 * 1024 * 1024, cap - 8 * 1024 * 1024))


def _target_rows():
    # v5e's MXU is 128 wide, so 128 matmul rows already fill it; v6e/v7x want 256.
    try:
        kind = jax.devices()[0].device_kind.lower()
        if "v5" in kind:
            return 128
    except Exception:
        pass
    return 256


def _pick_ff_tile(F, max_tf=1024):
    """ff_dim reduction tile: full F when small, else the largest multiple of
    128 that divides F and is <= max_tf (bounds W1/W2 blocks and the h1 tile)."""
    if F <= max_tf:
        return F
    best = 0
    for tf in range(128, max_tf + 1, 128):
        if F % tf == 0:
            best = tf
    return best if best else F


def _estimate_vmem_bytes(bb, T, D, F, tf, out_bytes, weight_bufs, num_heads):
    """Rough per-grid-step live-VMEM estimate (weights + I/O blocks + scratch +
    the dominant activation temporaries), with a 15% fudge factor."""
    bf16, f32 = 2, 4
    rows = bb * T
    hd = D // num_heads
    const_w = (3 * D * D + D * D) * bf16 + (3 * D + 4 * D) * f32 + T * T * f32
    ffn_w = (D * tf + tf * D) * bf16 + tf * f32
    ffn_bufs = weight_bufs if tf == F else 2          # tiled W1/W2 double-buffer
    weights = const_w * weight_bufs + ffn_w * ffn_bufs
    io = 2 * bb * T * D * bf16 + 2 * bb * T * D * out_bytes
    scratch = rows * D * bf16 + 2 * rows * D * f32
    temps = (rows * 3 * D * (f32 + bf16)              # qkv f32 result + bf16 copy
             + 2 * bb * T * T * f32                   # score block + exp
             + bb * T * hd * f32                      # per-head context
             + rows * D * f32                         # attn / residual
             + rows * tf * (f32 + bf16))              # h1 f32 + bf16
    return int(1.15 * (weights + io + scratch + temps))


def _pick_block_b(B, T, D, F, tf, out_bytes, num_heads, target_rows, vmem_budget,
                  weight_bufs):
    """Largest batch block that (a) leaves >= 2 grid steps when B >= 2 (v7x
    megacore + DMA pipelining), (b) fits the VMEM budget, (c) reaches the
    target matmul row count when possible."""
    max_bb = B if B < 2 else B // 2
    divisors = [d for d in range(1, max_bb + 1) if B % d == 0 and d * T <= 4096]
    if not divisors:
        divisors = [1]
    fitting = [d for d in divisors
               if _estimate_vmem_bytes(d, T, D, F, tf, out_bytes, weight_bufs,
                                       num_heads) <= vmem_budget]
    if not fitting:
        return divisors[0]
    for d in fitting:
        if d * T >= target_rows:
            return d
    return fitting[-1]


# --------------------- single-buffer capability probe ------------------------
def _probe_kernel(w_ref, o_ref):
    o_ref[...] = w_ref[...] + 1.0


@functools.lru_cache(maxsize=None)
def _single_buffer_supported():
    """Tiny isolated compile probing BlockSpec(pipeline_mode=pl.Buffered(1)).

    Kept separate from the real kernel so a capability failure here never masks
    genuine lowering/compile errors in the encoder kernel (review feedback)."""
    try:
        spec = pl.BlockSpec((8, 128), lambda i: (0, 0),
                            pipeline_mode=pl.Buffered(1))
        fn = pl.pallas_call(
            _probe_kernel,
            out_shape=jax.ShapeDtypeStruct((8, 128), jnp.float32),
            grid_spec=pltpu.PrefetchScalarGridSpec(
                num_scalar_prefetch=0, grid=(1,),
                in_specs=[spec],
                out_specs=pl.BlockSpec((8, 128), lambda i: (0, 0))),
        )
        jax.block_until_ready(fn(jnp.zeros((8, 128), jnp.float32)))
        return True
    except Exception:   # narrow scope: only this capability probe
        return False


# ------------------------------ builder / wrapper -----------------------------
def _build_encoder_call(B, T, D, F, bb, tf, num_heads, out_dtype, single_buffer):
    head_dim = D // num_heads
    rows = bb * T

    def const_spec(shape):
        # Grid-invariant weight blocks: single-buffer when supported so the
        # weights are not held twice in VMEM.
        if single_buffer:
            return pl.BlockSpec(shape, lambda b, f: (0, 0),
                                pipeline_mode=pl.Buffered(1))
        return pl.BlockSpec(shape, lambda b, f: (0, 0))

    if tf == F:
        w1_spec = const_spec((D, tf))
        b1_spec = const_spec((1, tf))
        w2_spec = const_spec((tf, D))
    else:
        # Tiled over the ff reduction: default double-buffering so the next
        # tile's DMA overlaps the current tile's matmuls.
        w1_spec = pl.BlockSpec((D, tf), lambda b, f: (0, f))
        b1_spec = pl.BlockSpec((1, tf), lambda b, f: (0, f))
        w2_spec = pl.BlockSpec((tf, D), lambda b, f: (f, 0))

    kernel = functools.partial(encoder_layer_kernel,
                               num_heads=num_heads, head_dim=head_dim)

    return pl.pallas_call(
        kernel,
        out_shape=jax.ShapeDtypeStruct((B, T, D), out_dtype),
        grid_spec=pltpu.PrefetchScalarGridSpec(
            num_scalar_prefetch=0,
            grid=(B // bb, F // tf),
            in_specs=[
                pl.BlockSpec((bb, T, D), lambda b, f: (b, 0, 0)),  # x (bf16)
                const_spec((T, T)),                                # mask (f32)
                const_spec((D, 3 * D)), const_spec((1, 3 * D)),    # Wqkv, bqkv
                const_spec((D, D)), const_spec((1, D)),            # Wfc, bfc
                w1_spec, b1_spec,                                  # W1, b1
                w2_spec, const_spec((1, D)),                       # W2, b2
                const_spec((1, D)), const_spec((1, D)),            # gamma, beta
            ],
            out_specs=pl.BlockSpec((bb, T, D), lambda b, f: (b, 0, 0)),
            scratch_shapes=[
                pltpu.VMEM((rows, D), jnp.bfloat16),   # per-head contexts
                pltpu.VMEM((rows, D), jnp.float32),    # y = LN(x + attn)
                pltpu.VMEM((rows, D), jnp.float32),    # FFN accumulator
            ],
        ),
        compiler_params=pltpu.CompilerParams(
            dimension_semantics=("parallel", "arbitrary"),
            vmem_limit_bytes=_vmem_limit_bytes(),
        ),
    )


def prepare_params(params, *, num_heads):
    """One-time weight prep: fuse Q|K|V, fold 1/sqrt(hd) into Q, cast to bf16."""
    D = params["wq"].shape[0]
    scale = 1.0 / math.sqrt(D // num_heads)
    wqkv = jnp.concatenate([params["wq"] * scale, params["wk"], params["wv"]], axis=1)
    bqkv = jnp.concatenate([params["bq"] * scale, params["bk"], params["bv"]], axis=1)
    bf16 = lambda a: a.astype(jnp.bfloat16)
    f32 = lambda a: a.astype(jnp.float32)
    return {
        "wqkv": bf16(wqkv), "bqkv": f32(bqkv),
        "wfc": bf16(params["wfc"]), "bfc": f32(params["bfc"]),
        "w1": bf16(params["w1"]), "b1": f32(params["b1"]),
        "w2": bf16(params["w2"]), "b2": f32(params["b2"]),
        "gamma": f32(params["gamma"]), "beta": f32(params["beta"]),
    }


def encoder_layer(x, mask, kparams, *, num_heads, block_b=None,
                  out_dtype=jnp.bfloat16):
    B, T, D = x.shape
    F = kparams["w1"].shape[1]
    tf = _pick_ff_tile(F)
    single_buffer = _single_buffer_supported()
    weight_bufs = 1 if single_buffer else 2
    out_bytes = jnp.dtype(out_dtype).itemsize
    if block_b is None:
        bb = _pick_block_b(B, T, D, F, tf, out_bytes, num_heads,
                           _target_rows(), _vmem_limit_bytes(), weight_bufs)
    else:
        bb = block_b
    assert B % bb == 0 and F % tf == 0

    args = (
        x.astype(jnp.bfloat16), mask.astype(jnp.float32),
        kparams["wqkv"], kparams["bqkv"],
        kparams["wfc"], kparams["bfc"],
        kparams["w1"], kparams["b1"], kparams["w2"], kparams["b2"],
        kparams["gamma"], kparams["beta"],
    )
    return _build_encoder_call(B, T, D, F, bb, tf, num_heads, out_dtype,
                               single_buffer)(*args)


# ---------------- pure-JAX reference (mirrors the PyTorch forward) -----------
def reference(x, mask, params, *, num_heads):
    B, T, D = x.shape
    hd = D // num_heads

    def lin(a, w, b):
        return a @ w + b

    q = lin(x, params["wq"], params["bq"])
    k = lin(x, params["wk"], params["bk"])
    v = lin(x, params["wv"], params["bv"])
    q = q.reshape(B, T, num_heads, hd).transpose(0, 2, 1, 3)
    k = k.reshape(B, T, num_heads, hd).transpose(0, 2, 1, 3)
    v = v.reshape(B, T, num_heads, hd).transpose(0, 2, 1, 3)
    s = jnp.einsum("bhqd,bhkd->bhqk", q, k) / math.sqrt(hd)
    s = s + mask[:T]
    p = jax.nn.softmax(s, axis=-1)
    a = jnp.einsum("bhqk,bhkd->bhqd", p, v).transpose(0, 2, 1, 3).reshape(B, T, -1)
    a = lin(a, params["wfc"], params["bfc"])

    def ln(z):
        mu = jnp.mean(z, axis=-1, keepdims=True)
        var = jnp.mean((z - mu) ** 2, axis=-1, keepdims=True)
        return (z - mu) / jnp.sqrt(var + 1e-5) * params["gamma"] + params["beta"]

    y = ln(x + a)
    h = jnp.maximum(lin(y, params["w1"], params["b1"]), 0.0)
    h = lin(h, params["w2"], params["b2"])
    return ln(y + h)


if __name__ == "__main__":
    def init_params(key, D, F):
        keys = jax.random.split(key, 12)

        def init_w(k, shape, fan_in):
            bound = 1.0 / math.sqrt(fan_in)
            return jax.random.uniform(k, shape, jnp.float32, -bound, bound)

        return {
            "wq": init_w(keys[0], (D, D), D),  "bq": init_w(keys[1], (1, D), D),
            "wk": init_w(keys[2], (D, D), D),  "bk": init_w(keys[3], (1, D), D),
            "wv": init_w(keys[4], (D, D), D),  "bv": init_w(keys[5], (1, D), D),
            "wfc": init_w(keys[6], (D, D), D), "bfc": init_w(keys[7], (1, D), D),
            "w1": init_w(keys[8], (D, F), D),  "b1": init_w(keys[9], (1, F), D),
            "w2": init_w(keys[10], (F, D), F), "b2": init_w(keys[11], (1, D), F),
            "gamma": jnp.ones((1, D), jnp.float32),
            "beta": jnp.zeros((1, D), jnp.float32),
        }

    key = jax.random.PRNGKey(0)
    k_small, k_big = jax.random.split(key)

    # --- small smoke test (shapes implied by the module) ---------------------
    B, T, D, F, H = 2, 8, 32, 64, 4
    kp, kx, km = jax.random.split(k_small, 3)
    params = init_params(kp, D, F)
    x = jax.random.normal(kx, (B, T, D), jnp.float32)
    mask = 0.1 * jax.random.normal(km, (T, T), jnp.float32)
    kparams = prepare_params(params, num_heads=H)
    out = jax.block_until_ready(encoder_layer(x, mask, kparams, num_heads=H))
    ref = reference(x, mask, params, num_heads=H)
    assert out.shape == (B, T, D)
    # bf16 inputs/weights/outputs (f32 accumulation) => loosened tolerance.
    assert jnp.allclose(out.astype(jnp.float32), ref, atol=5e-2, rtol=5e-2), \
        "small-shape mismatch vs reference"

    # --- lane-dense-size check (review: toy shapes are fully padded; verify a
    # size where T, D, F are real (8,128)-tile multiples) ----------------------
    B2, T2, D2, F2, H2 = 4, 128, 256, 512, 4
    kp2, kx2, km2 = jax.random.split(k_big, 3)
    params2 = init_params(kp2, D2, F2)
    x2 = jax.random.normal(kx2, (B2, T2, D2), jnp.float32)
    mask2 = 0.1 * jax.random.normal(km2, (T2, T2), jnp.float32)
    kparams2 = prepare_params(params2, num_heads=H2)
    out2 = jax.block_until_ready(encoder_layer(x2, mask2, kparams2, num_heads=H2))
    ref2 = reference(x2, mask2, params2, num_heads=H2)
    assert jnp.allclose(out2.astype(jnp.float32), ref2, atol=1e-1, rtol=1e-1), \
        "lane-dense-shape mismatch vs reference"

    print("KERNEL_OK")
</pallas_src>

<mosaic_0001>
module attributes {stable_mosaic.version = 11 : i64} {
  func.func @_probe_kernel(%arg0: i32, %arg1: memref<8x128xf32, #tpu.memory_space<vmem>>, %arg2: memref<8x128xf32, #tpu.memory_space<vmem>>) attributes {dimension_semantics = [#tpu.dimension_semantics<arbitrary>], iteration_bounds = array<i64: 1>, scalar_prefetch = 0 : i64, scratch_operands = 0 : i64, tpu.core_type = #tpu.core_type<tc>, window_params = [{pipeline_mode = #tpu.pipeline_mode<synchronous>, transform_indices = @transform_0, window_bounds = array<i64: 8, 128>}, {pipeline_mode = #tpu.pipeline_mode<synchronous>, transform_indices = @transform_1, window_bounds = array<i64: 8, 128>}]} {
    %c0 = arith.constant 0 : index
    %c0_0 = arith.constant 0 : index
    %0 = vector.load %arg1[%c0, %c0_0] : memref<8x128xf32, #tpu.memory_space<vmem>>, vector<8x128xf32>
    %cst = arith.constant 1.000000e+00 : f32
    %1 = vector.broadcast %cst : f32 to vector<8x128xf32>
    %2 = arith.addf %0, %1 : vector<8x128xf32>
    %c0_1 = arith.constant 0 : index
    %c0_2 = arith.constant 0 : index
    %3 = vector.load %arg2[%c0_1, %c0_2] : memref<8x128xf32, #tpu.memory_space<vmem>>, vector<8x128xf32>
    tpu.vector_store %arg2[%c0_1, %c0_2], %2 {strides = array<i32>} : memref<8x128xf32, #tpu.memory_space<vmem>>, vector<8x128xf32>,
    return
  }
  func.func @transform_0(%arg0: i32) -> (i32, i32) {
    %c0_i32 = arith.constant 0 : i32
    %c0_i32_0 = arith.constant 0 : i32
    %c0_i32_1 = arith.constant 0 : i32
    return %c0_i32, %c0_i32_0 : i32, i32
  }
  func.func @transform_1(%arg0: i32) -> (i32, i32) {
    %c0_i32 = arith.constant 0 : i32
    %c0_i32_0 = arith.constant 0 : i32
    %c0_i32_1 = arith.constant 0 : i32
    return %c0_i32, %c0_i32_0 : i32, i32
  }
}

module attributes {stable_mosaic.version = 11 : i64} {
  func.func @encoder_layer_kernel(%arg0: i32, %arg1: i32, %arg2: memref<1x8x32xbf16, #tpu.memory_space<vmem>>, %arg3: memref<8x8xf32, #tpu.memory_space<vmem>>, %arg4: memref<32x96xbf16, #tpu.memory_space<vmem>>, %arg5: memref<1x96xf32, #tpu.memory_space<vmem>>, %arg6: memref<32x32xbf16, #tpu.memory_space<vmem>>, %arg7: memref<1x32xf32, #tpu.memory_space<vmem>>, %arg8: memref<32x64xbf16, #tpu.memory_space<vmem>>, %arg9: memref<1x64xf32, #tpu.memory_space<vmem>>, %arg10: memref<64x32xbf16, #tpu.memory_space<vmem>>, %arg11: memref<1x32xf32, #tpu.memory_space<vmem>>, %arg12: memref<1x32xf32, #tpu.memory_space<vmem>>, %arg13: memref<1x32xf32, #tpu.memory_space<vmem>>, %arg14: memref<1x8x32xbf16, #tpu.memory_space<vmem>>, %arg15: memref<8x32xbf16, #tpu.memory_space<vmem>>, %arg16: memref<8x32xf32, #tpu.memory_space<vmem>>, %arg17: memref<8x32xf32, #tpu.memory_space<vmem>>) attributes {dimension_semantics = [#tpu.dimension_semantics<parallel>, #tpu.dimension_semantics<arbitrary>], iteration_bounds = array<i64: 2, 1>, scalar_prefetch = 0 : i64, scratch_operands = 3 : i64, tpu.core_type = #tpu.core_type<tc>, window_params = [{transform_indices = @transform_0, window_bounds = array<i64: 1, 8, 32>}, {pipeline_mode = #tpu.pipeline_mode<synchronous>, transform_indices = @transform_1, window_bounds = array<i64: 8, 8>}, {pipeline_mode = #tpu.pipeline_mode<synchronous>, transform_indices = @transform_2, window_bounds = array<i64: 32, 96>}, {pipeline_mode = #tpu.pipeline_mode<synchronous>, transform_indices = @transform_3, window_bounds = array<i64: 1, 96>}, {pipeline_mode = #tpu.pipeline_mode<synchronous>, transform_indices = @transform_4, window_bounds = array<i64: 32, 32>}, {pipeline_mode = #tpu.pipeline_mode<synchronous>, transform_indices = @transform_5, window_bounds = array<i64: 1, 32>}, {pipeline_mode = #tpu.pipeline_mode<synchronous>, transform_indices = @transform_6, window_bounds = array<i64: 32, 64>}, {pipeline_mode = #tpu.pipeline_mode<synchronous>, transform_indices = @transform_7, window_bounds = array<i64: 1, 64>}, {pipeline_mode = #tpu.pipeline_mode<synchronous>, transform_indices = @transform_8, window_bounds = array<i64: 64, 32>}, {pipeline_mode = #tpu.pipeline_mode<synchronous>, transform_indices = @transform_9, window_bounds = array<i64: 1, 32>}, {pipeline_mode = #tpu.pipeline_mode<synchronous>, transform_indices = @transform_10, window_bounds = array<i64: 1, 32>}, {pipeline_mode = #tpu.pipeline_mode<synchronous>, transform_indices = @transform_11, window_bounds = array<i64: 1, 32>}, {transform_indices = @transform_12, window_bounds = array<i64: 1, 8, 32>}]} {
    %c0_i32 = arith.constant 0 : i32
    %0 = arith.cmpi eq, %arg1, %c0_i32 : i32
    %1 = arith.extui %0 : i1 to i32
    %c0_i32_0 = arith.constant 0 : i32
    %2 = arith.cmpi ne, %1, %c0_i32_0 : i32
    scf.if %2 {
      %c0_16 = arith.constant 0 : index
      %c0_17 = arith.constant 0 : index
      %c0_18 = arith.constant 0 : index
      %21 = vector.load %arg2[%c0_16, %c0_17, %c0_18] : memref<1x8x32xbf16, #tpu.memory_space<vmem>>, vector<1x8x32xbf16>
      %22 = vector.shape_cast %21 : vector<1x8x32xbf16> to vector<8x32xbf16>
      %c0_19 = arith.constant 0 : index
      %c0_20 = arith.constant 0 : index
      %23 = vector.load %arg4[%c0_19, %c0_20] : memref<32x96xbf16, #tpu.memory_space<vmem>>, vector<32x96xbf16>
      %cst_21 = arith.constant dense<0.000000e+00> : vector<8x96xf32>
      %24 = tpu.matmul %22, %23, %cst_21 {dimension_numbers = #tpu.dot_dimension_numbers<[1], [0], [0], [1], [0, 0, 1, 1], [], []>} : vector<8x32xbf16>, vector<32x96xbf16>, vector<8x96xf32> -> vector<8x96xf32>
      %c0_22 = arith.constant 0 : index
      %c0_23 = arith.constant 0 : index
      %25 = vector.load %arg5[%c0_22, %c0_23] : memref<1x96xf32, #tpu.memory_space<vmem>>, vector<1x96xf32>
      %26 = vector.broadcast %25 : vector<1x96xf32> to vector<8x96xf32>
      %27 = arith.addf %24, %26 : vector<8x96xf32>
      %28 = arith.truncf %27 : vector<8x96xf32> to vector<8x96xbf16>
      %c0_24 = arith.constant 0 : index
      %c0_25 = arith.constant 0 : index
      %29 = vector.load %arg3[%c0_24, %c0_25] : memref<8x8xf32, #tpu.memory_space<vmem>>, vector<8x8xf32>
      %30 = vector.extract_strided_slice %28 {offsets = [0, 0], sizes = [8, 8], strides = [1, 1]} : vector<8x96xbf16> to vector<8x8xbf16>
      %31 = vector.shape_cast %30 : vector<8x8xbf16> to vector<1x8x8xbf16>
      %32 = vector.extract_strided_slice %28 {offsets = [0, 32], sizes = [8, 8], strides = [1, 1]} : vector<8x96xbf16> to vector<8x8xbf16>
      %33 = vector.shape_cast %32 : vector<8x8xbf16> to vector<1x8x8xbf16>
      %34 = vector.extract_strided_slice %28 {offsets = [0, 64], sizes = [8, 8], strides = [1, 1]} : vector<8x96xbf16> to vector<8x8xbf16>
      %35 = vector.shape_cast %34 : vector<8x8xbf16> to vector<1x8x8xbf16>
      %cst_26 = arith.constant dense<0.000000e+00> : vector<1x8x8xf32>
      %36 = tpu.matmul %31, %33, %cst_26 {dimension_numbers = #tpu.dot_dimension_numbers<[2], [2], [1], [1], [0, 0, 0, 1, 1, 1], [0], [0]>} : vector<1x8x8xbf16>, vector<1x8x8xbf16>, vector<1x8x8xf32> -> vector<1x8x8xf32>
      %37 = vector.shape_cast %29 : vector<8x8xf32> to vector<1x8x8xf32>
      %38 = arith.addf %36, %37 : vector<1x8x8xf32>
      %cst_27 = arith.constant dense<0xFF800000> : vector<1x8xf32>
      %39 = vector.multi_reduction <maximumf>, %38, %cst_27 [2] : vector<1x8x8xf32> to vector<1x8xf32>
      %40 = vector.shape_cast %39 : vector<1x8xf32> to vector<1x8x1xf32>
      %41 = vector.broadcast %40 : vector<1x8x1xf32> to vector<1x8x8xf32>
      %42 = arith.subf %38, %41 : vector<1x8x8xf32>
      %43 = math.exp %42 : vector<1x8x8xf32>
      %cst_28 = arith.constant dense<0.000000e+00> : vector<1x8xf32>
      %44 = vector.multi_reduction <add>, %43, %cst_28 [2] : vector<1x8x8xf32> to vector<1x8xf32>
      %45 = vector.shape_cast %44 : vector<1x8xf32> to vector<1x8x1xf32>
      %46 = arith.truncf %43 : vector<1x8x8xf32> to vector<1x8x8xbf16>
      %cst_29 = arith.constant dense<0.000000e+00> : vector<1x8x8xf32>
      %47 = tpu.matmul %46, %35, %cst_29 {dimension_numbers = #tpu.dot_dimension_numbers<[2], [1], [1], [2], [0, 0, 0, 1, 1, 2], [0], [0]>} : vector<1x8x8xbf16>, vector<1x8x8xbf16>, vector<1x8x8xf32> -> vector<1x8x8xf32>
      %48 = tpu.reciprocal %45 {approx = true} : vector<1x8x1xf32> -> vector<1x8x1xf32>
      %49 = vector.broadcast %48 : vector<1x8x1xf32> to vector<1x8x8xf32>
      %50 = arith.mulf %47, %49 : vector<1x8x8xf32>
      %51 = vector.shape_cast %50 : vector<1x8x8xf32> to vector<8x8xf32>
      %52 = arith.truncf %51 : vector<8x8xf32> to vector<8x8xbf16>
      %c0_30 = arith.constant 0 : index
      %c0_31 = arith.constant 0 : index
      %53 = vector.load %arg15[%c0_30, %c0_31] : memref<8x32xbf16, #tpu.memory_space<vmem>>, vector<8x8xbf16>
      tpu.vector_store %arg15[%c0_30, %c0_31], %52 {strides = array<i32>} : memref<8x32xbf16, #tpu.memory_space<vmem>>, vector<8x8xbf16>,
      %54 = vector.extract_strided_slice %28 {offsets = [0, 8], sizes = [8, 8], strides = [1, 1]} : vector<8x96xbf16> to vector<8x8xbf16>
      %55 = vector.shape_cast %54 : vector<8x8xbf16> to vector<1x8x8xbf16>
      %56 = vector.extract_strided_slice %28 {offsets = [0, 40], sizes = [8, 8], strides = [1, 1]} : vector<8x96xbf16> to vector<8x8xbf16>
      %57 = vector.shape_cast %56 : vector<8x8xbf16> to vector<1x8x8xbf16>
      %58 = vector.extract_strided_slice %28 {offsets = [0, 72], sizes = [8, 8], strides = [1, 1]} : vector<8x96xbf16> to vector<8x8xbf16>
      %59 = vector.shape_cast %58 : vector<8x8xbf16> to vector<1x8x8xbf16>
      %cst_32 = arith.constant dense<0.000000e+00> : vector<1x8x8xf32>
      %60 = tpu.matmul %55, %57, %cst_32 {dimension_numbers = #tpu.dot_dimension_numbers<[2], [2], [1], [1], [0, 0, 0, 1, 1, 1], [0], [0]>} : vector<1x8x8xbf16>, vector<1x8x8xbf16>, vector<1x8x8xf32> -> vector<1x8x8xf32>
      %61 = vector.shape_cast %29 : vector<8x8xf32> to vector<1x8x8xf32>
      %62 = arith.addf %60, %61 : vector<1x8x8xf32>
      %cst_33 = arith.constant dense<0xFF800000> : vector<1x8xf32>
      %63 = vector.multi_reduction <maximumf>, %62, %cst_33 [2] : vector<1x8x8xf32> to vector<1x8xf32>
      %64 = vector.shape_cast %63 : vector<1x8xf32> to vector<1x8x1xf32>
      %65 = vector.broadcast %64 : vector<1x8x1xf32> to vector<1x8x8xf32>
      %66 = arith.subf %62, %65 : vector<1x8x8xf32>
      %67 = math.exp %66 : vector<1x8x8xf32>
      %cst_34 = arith.constant dense<0.000000e+00> : vector<1x8xf32>
      %68 = vector.multi_reduction <add>, %67, %cst_34 [2] : vector<1x8x8xf32> to vector<1x8xf32>
      %69 = vector.shape_cast %68 : vector<1x8xf32> to vector<1x8x1xf32>
      %70 = arith.truncf %67 : vector<1x8x8xf32> to vector<1x8x8xbf16>
      %cst_35 = arith.constant dense<0.000000e+00> : vector<1x8x8xf32>
      %71 = tpu.matmul %70, %59, %cst_35 {dimension_numbers = #tpu.dot_dimension_numbers<[2], [1], [1], [2], [0, 0, 0, 1, 1, 2], [0], [0]>} : vector<1x8x8xbf16>, vector<1x8x8xbf16>, vector<1x8x8xf32> -> vector<1x8x8xf32>
      %72 = tpu.reciprocal %69 {approx = true} : vector<1x8x1xf32> -> vector<1x8x1xf32>
      %73 = vector.broadcast %72 : vector<1x8x1xf32> to vector<1x8x8xf32>
      %74 = arith.mulf %71, %73 : vector<1x8x8xf32>
      %75 = vector.shape_cast %74 : vector<1x8x8xf32> to vector<8x8xf32>
      %76 = arith.truncf %75 : vector<8x8xf32> to vector<8x8xbf16>
      %c0_36 = arith.constant 0 : index
      %c8 = arith.constant 8 : index
      %77 = vector.load %arg15[%c0_36, %c8] : memref<8x32xbf16, #tpu.memory_space<vmem>>, vector<8x8xbf16>
      tpu.vector_store %arg15[%c0_36, %c8], %76 {strides = array<i32>} : memref<8x32xbf16, #tpu.memory_space<vmem>>, vector<8x8xbf16>,
      %78 = vector.extract_strided_slice %28 {offsets = [0, 16], sizes = [8, 8], strides = [1, 1]} : vector<8x96xbf16> to vector<8x8xbf16>
      %79 = vector.shape_cast %78 : vector<8x8xbf16> to vector<1x8x8xbf16>
      %80 = vector.extract_strided_slice %28 {offsets = [0, 48], sizes = [8, 8], strides = [1, 1]} : vector<8x96xbf16> to vector<8x8xbf16>
      %81 = vector.shape_cast %80 : vector<8x8xbf16> to vector<1x8x8xbf16>
      %82 = vector.extract_strided_slice %28 {offsets = [0, 80], sizes = [8, 8], strides = [1, 1]} : vector<8x96xbf16> to vector<8x8xbf16>
      %83 = vector.shape_cast %82 : vector<8x8xbf16> to vector<1x8x8xbf16>
      %cst_37 = arith.constant dense<0.000000e+00> : vector<1x8x8xf32>
      %84 = tpu.matmul %79, %81, %cst_37 {dimension_numbers = #tpu.dot_dimension_numbers<[2], [2], [1], [1], [0, 0, 0, 1, 1, 1], [0], [0]>} : vector<1x8x8xbf16>, vector<1x8x8xbf16>, vector<1x8x8xf32> -> vector<1x8x8xf32>
      %85 = vector.shape_cast %29 : vector<8x8xf32> to vector<1x8x8xf32>
      %86 = arith.addf %84, %85 : vector<1x8x8xf32>
      %cst_38 = arith.constant dense<0xFF800000> : vector<1x8xf32>
      %87 = vector.multi_reduction <maximumf>, %86, %cst_38 [2] : vector<1x8x8xf32> to vector<1x8xf32>
      %88 = vector.shape_cast %87 : vector<1x8xf32> to vector<1x8x1xf32>
      %89 = vector.broadcast %88 : vector<1x8x1xf32> to vector<1x8x8xf32>
      %90 = arith.subf %86, %89 : vector<1x8x8xf32>
      %91 = math.exp %90 : vector<1x8x8xf32>
      %cst_39 = arith.constant dense<0.000000e+00> : vector<1x8xf32>
      %92 = vector.multi_reduction <add>, %91, %cst_39 [2] : vector<1x8x8xf32> to vector<1x8xf32>
      %93 = vector.shape_cast %92 : vector<1x8xf32> to vector<1x8x1xf32>
      %94 = arith.truncf %91 : vector<1x8x8xf32> to vector<1x8x8xbf16>
      %cst_40 = arith.constant dense<0.000000e+00> : vector<1x8x8xf32>
      %95 = tpu.matmul %94, %83, %cst_40 {dimension_numbers = #tpu.dot_dimension_numbers<[2], [1], [1], [2], [0, 0, 0, 1, 1, 2], [0], [0]>} : vector<1x8x8xbf16>, vector<1x8x8xbf16>, vector<1x8x8xf32> -> vector<1x8x8xf32>
      %96 = tpu.reciprocal %93 {approx = true} : vector<1x8x1xf32> -> vector<1x8x1xf32>
      %97 = vector.broadcast %96 : vector<1x8x1xf32> to vector<1x8x8xf32>
      %98 = arith.mulf %95, %97 : vector<1x8x8xf32>
      %99 = vector.shape_cast %98 : vector<1x8x8xf32> to vector<8x8xf32>
      %100 = arith.truncf %99 : vector<8x8xf32> to vector<8x8xbf16>
      %c0_41 = arith.constant 0 : index
      %c16 = arith.constant 16 : index
      %101 = vector.load %arg15[%c0_41, %c16] : memref<8x32xbf16, #tpu.memory_space<vmem>>, vector<8x8xbf16>
      tpu.vector_store %arg15[%c0_41, %c16], %100 {strides = array<i32>} : memref<8x32xbf16, #tpu.memory_space<vmem>>, vector<8x8xbf16>,
      %102 = vector.extract_strided_slice %28 {offsets = [0, 24], sizes = [8, 8], strides = [1, 1]} : vector<8x96xbf16> to vector<8x8xbf16>
      %103 = vector.shape_cast %102 : vector<8x8xbf16> to vector<1x8x8xbf16>
      %104 = vector.extract_strided_slice %28 {offsets = [0, 56], sizes = [8, 8], strides = [1, 1]} : vector<8x96xbf16> to vector<8x8xbf16>
      %105 = vector.shape_cast %104 : vector<8x8xbf16> to vector<1x8x8xbf16>
      %106 = vector.extract_strided_slice %28 {offsets = [0, 88], sizes = [8, 8], strides = [1, 1]} : vector<8x96xbf16> to vector<8x8xbf16>
      %107 = vector.shape_cast %106 : vector<8x8xbf16> to vector<1x8x8xbf16>
      %cst_42 = arith.constant dense<0.000000e+00> : vector<1x8x8xf32>
      %108 = tpu.matmul %103, %105, %cst_42 {dimension_numbers = #tpu.dot_dimension_numbers<[2], [2], [1], [1], [0, 0, 0, 1, 1, 1], [0], [0]>} : vector<1x8x8xbf16>, vector<1x8x8xbf16>, vector<1x8x8xf32> -> vector<1x8x8xf32>
      %109 = vector.shape_cast %29 : vector<8x8xf32> to vector<1x8x8xf32>
      %110 = arith.addf %108, %109 : vector<1x8x8xf32>
      %cst_43 = arith.constant dense<0xFF800000> : vector<1x8xf32>
      %111 = vector.multi_reduction <maximumf>, %110, %cst_43 [2] : vector<1x8x8xf32> to vector<1x8xf32>
      %112 = vector.shape_cast %111 : vector<1x8xf32> to vector<1x8x1xf32>
      %113 = vector.broadcast %112 : vector<1x8x1xf32> to vector<1x8x8xf32>
      %114 = arith.subf %110, %113 : vector<1x8x8xf32>
      %115 = math.exp %114 : vector<1x8x8xf32>
      %cst_44 = arith.constant dense<0.000000e+00> : vector<1x8xf32>
      %116 = vector.multi_reduction <add>, %115, %cst_44 [2] : vector<1x8x8xf32> to vector<1x8xf32>
      %117 = vector.shape_cast %116 : vector<1x8xf32> to vector<1x8x1xf32>
      %118 = arith.truncf %115 : vector<1x8x8xf32> to vector<1x8x8xbf16>
      %cst_45 = arith.constant dense<0.000000e+00> : vector<1x8x8xf32>
      %119 = tpu.matmul %118, %107, %cst_45 {dimension_numbers = #tpu.dot_dimension_numbers<[2], [1], [1], [2], [0, 0, 0, 1, 1, 2], [0], [0]>} : vector<1x8x8xbf16>, vector<1x8x8xbf16>, vector<1x8x8xf32> -> vector<1x8x8xf32>
      %120 = tpu.reciprocal %117 {approx = true} : vector<1x8x1xf32> -> vector<1x8x1xf32>
      %121 = vector.broadcast %120 : vector<1x8x1xf32> to vector<1x8x8xf32>
      %122 = arith.mulf %119, %121 : vector<1x8x8xf32>
      %123 = vector.shape_cast %122 : vector<1x8x8xf32> to vector<8x8xf32>
      %124 = arith.truncf %123 : vector<8x8xf32> to vector<8x8xbf16>
      %c0_46 = arith.constant 0 : index
      %c24 = arith.constant 24 : index
      %125 = vector.load %arg15[%c0_46, %c24] : memref<8x32xbf16, #tpu.memory_space<vmem>>, vector<8x8xbf16>
      tpu.vector_store %arg15[%c0_46, %c24], %124 {strides = array<i32>} : memref<8x32xbf16, #tpu.memory_space<vmem>>, vector<8x8xbf16>,
      %c0_47 = arith.constant 0 : index
      %c0_48 = arith.constant 0 : index
      %126 = vector.load %arg15[%c0_47, %c0_48] : memref<8x32xbf16, #tpu.memory_space<vmem>>, vector<8x32xbf16>
      %c0_49 = arith.constant 0 : index
      %c0_50 = arith.constant 0 : index
      %127 = vector.load %arg6[%c0_49, %c0_50] : memref<32x32xbf16, #tpu.memory_space<vmem>>, vector<32x32xbf16>
      %cst_51 = arith.constant dense<0.000000e+00> : vector<8x32xf32>
      %128 = tpu.matmul %126, %127, %cst_51 {dimension_numbers = #tpu.dot_dimension_numbers<[1], [0], [0], [1], [0, 0, 1, 1], [], []>} : vector<8x32xbf16>, vector<32x32xbf16>, vector<8x32xf32> -> vector<8x32xf32>
      %c0_52 = arith.constant 0 : index
      %c0_53 = arith.constant 0 : index
      %129 = vector.load %arg7[%c0_52, %c0_53] : memref<1x32xf32, #tpu.memory_space<vmem>>, vector<1x32xf32>
      %130 = vector.broadcast %129 : vector<1x32xf32> to vector<8x32xf32>
      %131 = arith.addf %128, %130 : vector<8x32xf32>
      %132 = arith.extf %22 : vector<8x32xbf16> to vector<8x32xf32>
      %133 = arith.addf %132, %131 : vector<8x32xf32>
      %c0_54 = arith.constant 0 : index
      %c0_55 = arith.constant 0 : index
      %134 = vector.load %arg12[%c0_54, %c0_55] : memref<1x32xf32, #tpu.memory_space<vmem>>, vector<1x32xf32>
      %c0_56 = arith.constant 0 : index
      %c0_57 = arith.constant 0 : index
      %135 = vector.load %arg13[%c0_56, %c0_57] : memref<1x32xf32, #tpu.memory_space<vmem>>, vector<1x32xf32>
      %cst_58 = arith.constant dense<0.000000e+00> : vector<8xf32>
      %136 = vector.multi_reduction <add>, %133, %cst_58 [1] : vector<8x32xf32> to vector<8xf32>
      %137 = vector.shape_cast %136 : vector<8xf32> to vector<8x1xf32>
      %cst_59 = arith.constant 3.200000e+01 : f32
      %138 = vector.broadcast %cst_59 : f32 to vector<8x1xf32>
      %139 = arith.divf %137, %138 : vector<8x1xf32>
      %140 = vector.broadcast %139 : vector<8x1xf32> to vector<8x32xf32>
      %141 = arith.subf %133, %140 : vector<8x32xf32>
      %142 = arith.mulf %141, %141 : vector<8x32xf32>
      %cst_60 = arith.constant dense<0.000000e+00> : vector<8xf32>
      %143 = vector.multi_reduction <add>, %142, %cst_60 [1] : vector<8x32xf32> to vector<8xf32>
      %144 = vector.shape_cast %143 : vector<8xf32> to vector<8x1xf32>
      %cst_61 = arith.constant 3.200000e+01 : f32
      %145 = vector.broadcast %cst_61 : f32 to vector<8x1xf32>
      %146 = arith.divf %144, %145 : vector<8x1xf32>
      %cst_62 = arith.constant 9.99999974E-6 : f32
      %147 = vector.broadcast %cst_62 : f32 to vector<8x1xf32>
      %148 = arith.addf %146, %147 : vector<8x1xf32>
      %149 = math.rsqrt %148 : vector<8x1xf32>
      %150 = vector.broadcast %149 : vector<8x1xf32> to vector<8x32xf32>
      %151 = arith.mulf %141, %150 : vector<8x32xf32>
      %152 = vector.broadcast %134 : vector<1x32xf32> to vector<8x32xf32>
      %153 = arith.mulf %151, %152 : vector<8x32xf32>
      %154 = vector.broadcast %135 : vector<1x32xf32> to vector<8x32xf32>
      %155 = arith.addf %153, %154 : vector<8x32xf32>
      %c0_63 = arith.constant 0 : index
      %c0_64 = arith.constant 0 : index
      %156 = vector.load %arg16[%c0_63, %c0_64] : memref<8x32xf32, #tpu.memory_space<vmem>>, vector<8x32xf32>
      tpu.vector_store %arg16[%c0_63, %c0_64], %155 {strides = array<i32>} : memref<8x32xf32, #tpu.memory_space<vmem>>, vector<8x32xf32>,
      %cst_65 = arith.constant 0.000000e+00 : f32
      %157 = vector.broadcast %cst_65 : f32 to vector<8x32xf32>
      %c0_66 = arith.constant 0 : index
      %c0_67 = arith.constant 0 : index
      %158 = vector.load %arg17[%c0_66, %c0_67] : memref<8x32xf32, #tpu.memory_space<vmem>>, vector<8x32xf32>
      tpu.vector_store %arg17[%c0_66, %c0_67], %157 {strides = array<i32>} : memref<8x32xf32, #tpu.memory_space<vmem>>, vector<8x32xf32>,
    } else {
    }
    %c0 = arith.constant 0 : index
    %c0_1 = arith.constant 0 : index
    %3 = vector.load %arg16[%c0, %c0_1] : memref<8x32xf32, #tpu.memory_space<vmem>>, vector<8x32xf32>
    %4 = arith.truncf %3 : vector<8x32xf32> to vector<8x32xbf16>
    %c0_2 = arith.constant 0 : index
    %c0_3 = arith.constant 0 : index
    %5 = vector.load %arg8[%c0_2, %c0_3] : memref<32x64xbf16, #tpu.memory_space<vmem>>, vector<32x64xbf16>
    %cst = arith.constant dense<0.000000e+00> : vector<8x64xf32>
    %6 = tpu.matmul %4, %5, %cst {dimension_numbers = #tpu.dot_dimension_numbers<[1], [0], [0], [1], [0, 0, 1, 1], [], []>} : vector<8x32xbf16>, vector<32x64xbf16>, vector<8x64xf32> -> vector<8x64xf32>
    %c0_4 = arith.constant 0 : index
    %c0_5 = arith.constant 0 : index
    %7 = vector.load %arg9[%c0_4, %c0_5] : memref<1x64xf32, #tpu.memory_space<vmem>>, vector<1x64xf32>
    %8 = vector.broadcast %7 : vector<1x64xf32> to vector<8x64xf32>
    %9 = arith.addf %6, %8 : vector<8x64xf32>
    %cst_6 = arith.constant 0.000000e+00 : f32
    %10 = vector.broadcast %cst_6 : f32 to vector<8x64xf32>
    %11 = arith.maximumf %9, %10 : vector<8x64xf32>
    %12 = arith.truncf %11 : vector<8x64xf32> to vector<8x64xbf16>
    %c0_7 = arith.constant 0 : index
    %c0_8 = arith.constant 0 : index
    %13 = vector.load %arg17[%c0_7, %c0_8] : memref<8x32xf32, #tpu.memory_space<vmem>>, vector<8x32xf32>
    %c0_9 = arith.constant 0 : index
    %c0_10 = arith.constant 0 : index
    %14 = vector.load %arg10[%c0_9, %c0_10] : memref<64x32xbf16, #tpu.memory_space<vmem>>, vector<64x32xbf16>
    %cst_11 = arith.constant dense<0.000000e+00> : vector<8x32xf32>
    %15 = tpu.matmul %12, %14, %cst_11 {dimension_numbers = #tpu.dot_dimension_numbers<[1], [0], [0], [1], [0, 0, 1, 1], [], []>} : vector<8x64xbf16>, vector<64x32xbf16>, vector<8x32xf32> -> vector<8x32xf32>
    %16 = arith.addf %13, %15 : vector<8x32xf32>
    %c0_12 = arith.constant 0 : index
    %c0_13 = arith.constant 0 : index
    %17 = vector.load %arg17[%c0_12, %c0_13] : memref<8x32xf32, #tpu.memory_space<vmem>>, vector<8x32xf32>
    tpu.vector_store %arg17[%c0_12, %c0_13], %16 {strides = array<i32>} : memref<8x32xf32, #tpu.memory_space<vmem>>, vector<8x32xf32>,
    %c0_i32_14 = arith.constant 0 : i32
    %18 = arith.cmpi eq, %arg1, %c0_i32_14 : i32
    %19 = arith.extui %18 : i1 to i32
    %c0_i32_15 = arith.constant 0 : i32
    %20 = arith.cmpi ne, %19, %c0_i32_15 : i32
    scf.if %20 {
      %c0_16 = arith.constant 0 : index
      %c0_17 = arith.constant 0 : index
      %21 = vector.load %arg17[%c0_16, %c0_17] : memref<8x32xf32, #tpu.memory_space<vmem>>, vector<8x32xf32>
      %c0_18 = arith.constant 0 : index
      %c0_19 = arith.constant 0 : index
      %22 = vector.load %arg11[%c0_18, %c0_19] : memref<1x32xf32, #tpu.memory_space<vmem>>, vector<1x32xf32>
      %23 = vector.broadcast %22 : vector<1x32xf32> to vector<8x32xf32>
      %24 = arith.addf %21, %23 : vector<8x32xf32>
      %c0_20 = arith.constant 0 : index
      %c0_21 = arith.constant 0 : index
      %25 = vector.load %arg16[%c0_20, %c0_21] : memref<8x32xf32, #tpu.memory_space<vmem>>, vector<8x32xf32>
      %26 = arith.addf %25, %24 : vector<8x32xf32>
      %c0_22 = arith.constant 0 : index
      %c0_23 = arith.constant 0 : index
      %27 = vector.load %arg12[%c0_22, %c0_23] : memref<1x32xf32, #tpu.memory_space<vmem>>, vector<1x32xf32>
      %c0_24 = arith.constant 0 : index
      %c0_25 = arith.constant 0 : index
      %28 = vector.load %arg13[%c0_24, %c0_25] : memref<1x32xf32, #tpu.memory_space<vmem>>, vector<1x32xf32>
      %cst_26 = arith.constant dense<0.000000e+00> : vector<8xf32>
      %29 = vector.multi_reduction <add>, %26, %cst_26 [1] : vector<8x32xf32> to vector<8xf32>
      %30 = vector.shape_cast %29 : vector<8xf32> to vector<8x1xf32>
      %cst_27 = arith.constant 3.200000e+01 : f32
      %31 = vector.broadcast %cst_27 : f32 to vector<8x1xf32>
      %32 = arith.divf %30, %31 : vector<8x1xf32>
      %33 = vector.broadcast %32 : vector<8x1xf32> to vector<8x32xf32>
      %34 = arith.subf %26, %33 : vector<8x32xf32>
      %35 = arith.mulf %34, %34 : vector<8x32xf32>
      %cst_28 = arith.constant dense<0.000000e+00> : vector<8xf32>
      %36 = vector.multi_reduction <add>, %35, %cst_28 [1] : vector<8x32xf32> to vector<8xf32>
      %37 = vector.shape_cast %36 : vector<8xf32> to vector<8x1xf32>
      %cst_29 = arith.constant 3.200000e+01 : f32
      %38 = vector.broadcast %cst_29 : f32 to vector<8x1xf32>
      %39 = arith.divf %37, %38 : vector<8x1xf32>
      %cst_30 = arith.constant 9.99999974E-6 : f32
      %40 = vector.broadcast %cst_30 : f32 to vector<8x1xf32>
      %41 = arith.addf %39, %40 : vector<8x1xf32>
      %42 = math.rsqrt %41 : vector<8x1xf32>
      %43 = vector.broadcast %42 : vector<8x1xf32> to vector<8x32xf32>
      %44 = arith.mulf %34, %43 : vector<8x32xf32>
      %45 = vector.broadcast %27 : vector<1x32xf32> to vector<8x32xf32>
      %46 = arith.mulf %44, %45 : vector<8x32xf32>
      %47 = vector.broadcast %28 : vector<1x32xf32> to vector<8x32xf32>
      %48 = arith.addf %46, %47 : vector<8x32xf32>
      %49 = vector.shape_cast %48 : vector<8x32xf32> to vector<1x8x32xf32>
      %50 = arith.truncf %49 : vector<1x8x32xf32> to vector<1x8x32xbf16>
      %c0_31 = arith.constant 0 : index
      %c0_32 = arith.constant 0 : index
      %c0_33 = arith.constant 0 : index
      %51 = vector.load %arg14[%c0_31, %c0_32, %c0_33] : memref<1x8x32xbf16, #tpu.memory_space<vmem>>, vector<1x8x32xbf16>
      tpu.vector_store %arg14[%c0_31, %c0_32, %c0_33], %50 {strides = array<i32>} : memref<1x8x32xbf16, #tpu.memory_space<vmem>>, vector<1x8x32xbf16>,
    } else {
    }
    return
  }
  func.func @transform_0(%arg0: i32, %arg1: i32) -> (i32, i32, i32) {
    %c0_i32 = arith.constant 0 : i32
    %c0_i32_0 = arith.constant 0 : i32
    %c0_i32_1 = arith.constant 0 : i32
    return %arg0, %c0_i32, %c0_i32_0 : i32, i32, i32
  }
  func.func @transform_1(%arg0: i32, %arg1: i32) -> (i32, i32) {
    %c0_i32 = arith.constant 0 : i32
    %c0_i32_0 = arith.constant 0 : i32
    %c0_i32_1 = arith.constant 0 : i32
    return %c0_i32, %c0_i32_0 : i32, i32
  }
  func.func @transform_2(%arg0: i32, %arg1: i32) -> (i32, i32) {
    %c0_i32 = arith.constant 0 : i32
    %c0_i32_0 = arith.constant 0 : i32
    %c0_i32_1 = arith.constant 0 : i32
    return %c0_i32, %c0_i32_0 : i32, i32
  }
  func.func @transform_3(%arg0: i32, %arg1: i32) -> (i32, i32) {
    %c0_i32 = arith.constant 0 : i32
    %c0_i32_0 = arith.constant 0 : i32
    %c0_i32_1 = arith.constant 0 : i32
    return %c0_i32, %c0_i32_0 : i32, i32
  }
  func.func @transform_4(%arg0: i32, %arg1: i32) -> (i32, i32) {
    %c0_i32 = arith.constant 0 : i32
    %c0_i32_0 = arith.constant 0 : i32
    %c0_i32_1 = arith.constant 0 : i32
    return %c0_i32, %c0_i32_0 : i32, i32
  }
  func.func @transform_5(%arg0: i32, %arg1: i32) -> (i32, i32) {
    %c0_i32 = arith.constant 0 : i32
    %c0_i32_0 = arith.constant 0 : i32
    %c0_i32_1 = arith.constant 0 : i32
    return %c0_i32, %c0_i32_0 : i32, i32
  }
  func.func @transform_6(%arg0: i32, %arg1: i32) -> (i32, i32) {
    %c0_i32 = arith.constant 0 : i32
    %c0_i32_0 = arith.constant 0 : i32
    %c0_i32_1 = arith.constant 0 : i32
    return %c0_i32, %c0_i32_0 : i32, i32
  }
  func.func @transform_7(%arg0: i32, %arg1: i32) -> (i32, i32) {
    %c0_i32 = arith.constant 0 : i32
    %c0_i32_0 = arith.constant 0 : i32
    %c0_i32_1 = arith.constant 0 : i32
    return %c0_i32, %c0_i32_0 : i32, i32
  }
  func.func @transform_8(%arg0: i32, %arg1: i32) -> (i32, i32) {
    %c0_i32 = arith.constant 0 : i32
    %c0_i32_0 = arith.constant 0 : i32
    %c0_i32_1 = arith.constant 0 : i32
    return %c0_i32, %c0_i32_0 : i32, i32
  }
  func.func @transform_9(%arg0: i32, %arg1: i32) -> (i32, i32) {
    %c0_i32 = arith.constant 0 : i32
    %c0_i32_0 = arith.constant 0 : i32
    %c0_i32_1 = arith.constant 0 : i32
    return %c0_i32, %c0_i32_0 : i32, i32
  }
  func.func @transform_10(%arg0: i32, %arg1: i32) -> (i32, i32) {
    %c0_i32 = arith.constant 0 : i32
    %c0_i32_0 = arith.constant 0 : i32
    %c0_i32_1 = arith.constant 0 : i32
    return %c0_i32, %c0_i32_0 : i32, i32
  }
  func.func @transform_11(%arg0: i32, %arg1: i32) -> (i32, i32) {
    %c0_i32 = arith.constant 0 : i32
    %c0_i32_0 = arith.constant 0 : i32
    %c0_i32_1 = arith.constant 0 : i32
    return %c0_i32, %c0_i32_0 : i32, i32
  }
  func.func @transform_12(%arg0: i32, %arg1: i32) -> (i32, i32, i32) {
    %c0_i32 = arith.constant 0 : i32
    %c0_i32_0 = arith.constant 0 : i32
    %c0_i32_1 = arith.constant 0 : i32
    return %arg0, %c0_i32, %c0_i32_0 : i32, i32, i32
  }
}

</mosaic_0001>

<llo_original>
// kernel: tpu_custom_call.1
$region0: #{tpu_custom_call.1}
  #allocation0 [shape = 'u32[]', space=smem, size = 0x4, offset = 0x4, fixed_abs, tag = 'smem constant byte address 0x4 - core index']
  #allocation1 [shape = 'u32[72,128]{1,0:T(1,128)}', space=vmem, size = 0x9000, scoped, tag = 'internal scratch']
  %s0 = inlined_call_operand.hbm [shape: f32[8,128], index: 0, kind: input, shape index: {}]
  %s1 = inlined_call_operand.hbm [shape: f32[8,128], index: 1, kind: output, shape index: {}]
  %s2 = sld [smem:[#allocation0]]
  $region18: #{tpu_custom_call.1} parent=0
    _
  %s4 = ssub.s32 1, %s2
  %s5 = scalar_select 0, %s4, %s2
  $region1: #{tpu_custom_call.1} parent=0
    #allocation2 [shape = 'u8[4096]{0}', space=vmem, size = 0x1000, scoped, tag = 'input window, operand 0, single buffered']
    #allocation3 [shape = 's32[1]{0}', space=sflag, size = 0x4, scoped, tag = 'scoped memory for tpu_custom_call.1']
    #allocation4 [shape = 's32[1]{0}', space=sflag, size = 0x4, scoped, tag = 'scoped memory for tpu_custom_call.1']
    #allocation5 [shape = 'u8[4096]{0}', space=vmem, size = 0x1000, scoped, tag = 'output window, operand 0, single buffered']
    %6 = vsyncpa [#allocation3], 0
    %7 = vsyncpa [#allocation4], 0
    // Predicated region
    $region2: #{tpu_custom_call.1} parent=1 // pred_check
      _
    $region3: #{tpu_custom_call.1} parent=1 // pred_check_branch
      %9 = sbr.rel (0) target = $region5
    $region4: #{tpu_custom_call.1} parent=1 // pred_region
      %11 = vsyncadd [#allocation3], 0
      %s13 = sshll.u32 %s0, 4
      %s14 = int_to_ptr.hbm [resolvable:$true] %s13
      %s15 = sshll.u32 [#allocation2], 4
      %s16 = int_to_ptr.vmem [resolvable:$true] %s15
      %18 = dma.hbm_to_vmem [thread:$0]  %s14, 128, %s16, [#allocation3]
    $region5: #{tpu_custom_call.1} parent=1 // pred_fallthru
      _
    // Predicated region
    $region6: #{tpu_custom_call.1} parent=1 // pred_check
      _
    $region7: #{tpu_custom_call.1} parent=1 // pred_check_branch
      %20 = sbr.rel (0) target = $region9
    $region8: #{tpu_custom_call.1} parent=1 // pred_region
      %22 = dma.done [#allocation3], 128
    $region9: #{tpu_custom_call.1} parent=1 // pred_fallthru
      _
    %v23 = vld [vmem:[#allocation2] sm:$0xff]
    %v24 = vadd.f32 %v23, 1.0
    %25 = vst [vmem:[#allocation5] sm:$0xff] %v24
    // Predicated region
    $region10: #{tpu_custom_call.1} parent=1 // pred_check
      _
    $region11: #{tpu_custom_call.1} parent=1 // pred_check_branch
      %27 = sbr.rel (0) target = $region13
    $region12: #{tpu_custom_call.1} parent=1 // pred_region
      %29 = vsyncadd [#allocation4], 0
      %s31 = sshll.u32 [#allocation5], 4
      %s32 = int_to_ptr.vmem [resolvable:$true] %s31
      %s33 = sshll.u32 %s1, 4
      %s34 = int_to_ptr.hbm [resolvable:$true] %s33
      %36 = dma.vmem_to_hbm [thread:$0]  %s32, 128, %s34, [#allocation4]
    $region13: #{tpu_custom_call.1} parent=1 // pred_fallthru
      _
    // Predicated region
    $region14: #{tpu_custom_call.1} parent=1 // pred_check
      _
    $region15: #{tpu_custom_call.1} parent=1 // pred_check_branch
      %38 = sbr.rel (0) target = $region17
    $region16: #{tpu_custom_call.1} parent=1 // pred_region
      %40 = dma.done [#allocation4], 128
    $region17: #{tpu_custom_call.1} parent=1 // pred_fallthru
      _
    %41 = vsyncpa [#allocation3], 1
    %42 = vsyncpa [#allocation4], 1

// kernel: tpu_custom_call.1
$region0: #{tpu_custom_call.1}
  #allocation0 [shape = 'u32[]', space=smem, size = 0x4, offset = 0x4, fixed_abs, tag = 'smem constant byte address 0x4 - core index']
  #allocation1 [shape = 'u32[72,128]{1,0:T(1,128)}', space=vmem, size = 0x9000, scoped, tag = 'internal scratch']
  #allocation2 [shape = 'bf16[8,32]{1,0:T(8,128)(2,1)}', space=vmem, size = 0x800, scoped, tag = 'scratch operand']
  #allocation3 [shape = 'f32[8,32]{1,0:T(8,128)}', space=vmem, size = 0x1000, scoped, tag = 'scratch operand']
  #allocation4 [shape = 'f32[8,32]{1,0:T(8,128)}', space=vmem, size = 0x1000, scoped, tag = 'scratch operand']
  %s0 = inlined_call_operand.hbm [shape: bf16[2,8,32], index: 0, kind: input, shape index: {}]
  %s1 = inlined_call_operand.hbm [shape: f32[8,8], index: 1, kind: input, shape index: {}]
  %s2 = inlined_call_operand.vmem [shape: bf16[32,96], index: 2, kind: input, shape index: {}]
  %s3 = inlined_call_operand.vmem [shape: f32[1,96], index: 3, kind: input, shape index: {}]
  %s4 = inlined_call_operand.vmem [shape: bf16[32,32], index: 4, kind: input, shape index: {}]
  %s5 = inlined_call_operand.vmem [shape: f32[1,32], index: 5, kind: input, shape index: {}]
  %s6 = inlined_call_operand.vmem [shape: bf16[32,64], index: 6, kind: input, shape index: {}]
  %s7 = inlined_call_operand.vmem [shape: f32[1,64], index: 7, kind: input, shape index: {}]
  %s8 = inlined_call_operand.vmem [shape: bf16[64,32], index: 8, kind: input, shape index: {}]
  %s9 = inlined_call_operand.vmem [shape: f32[1,32], index: 9, kind: input, shape index: {}]
  %s10 = inlined_call_operand.vmem [shape: f32[1,32], index: 10, kind: input, shape index: {}]
  %s11 = inlined_call_operand.vmem [shape: f32[1,32], index: 11, kind: input, shape index: {}]
  %s12 = inlined_call_operand.hbm [shape: bf16[2,8,32], index: 12, kind: output, shape index: {}]
  %s13 = sld [smem:[#allocation0]]
  $region97: #{tpu_custom_call.1} parent=0
    _
  %s15 = ssub.s32 1, %s13
  %s16 = scalar_select 0, %s15, %s13
  $region1: #{tpu_custom_call.1} parent=0
    #allocation5 [shape = 'u8[4096]{0}', space=vmem, size = 0x1000, scoped, tag = 'input window, operand 0']
    #allocation6 [shape = 's32[2]{0}', space=sflag, size = 0x8, scoped, tag = 'scoped memory for tpu_custom_call.1']
    #allocation7 [shape = 's32[2]{0}', space=sflag, size = 0x8, scoped, tag = 'scoped memory for tpu_custom_call.1']
    #allocation8 [shape = 'u8[4096]{0}', space=vmem, size = 0x1000, scoped, tag = 'input window, operand 1, single buffered']
    #allocation9 [shape = 's32[1]{0}', space=sflag, size = 0x4, scoped, tag = 'scoped memory for tpu_custom_call.1']
    #allocation10 [shape = 'u8[4096]{0}', space=vmem, size = 0x1000, scoped, tag = 'output window, operand 0']
    %17 = vsyncpa [#allocation6], 0
    %s18 = scalar_lea.sflag [#allocation6], 1
    %19 = vsyncpa %s18, 0
    %20 = vsyncpa [#allocation9], 0
    %21 = vsyncpa [#allocation7], 0
    %s22 = scalar_lea.sflag [#allocation7], 1
    %23 = vsyncpa %s22, 0
    loop: start=0, step=1, limit=4
    $region2: #{tpu_custom_call.1} parent=1 // loop_pre_header
      _
    $region3: #{tpu_custom_call.1} parent=1 // loop_header
      %s25 = sphi 0, %s29
      %p26 = scmp.ge.s32.totalorder %s25, 4
      %s32 = sphi 0, %s44
      %s33 = sphi 0, %s40
      %s34 = sphi 0, %s32
      %s35 = sphi 0, %s33
      %s36 = sphi 0, %s34
      %s37 = sphi 0, %s35
      %s47 = sphi 0, %s49
      %s50 = sphi 0, %s47
      %s51 = sphi 0, %s50
      %s67 = sphi 0, %s51
      %s71 = sphi 0, %s71
      %s73 = sphi 0, %s71
      %s74 = sphi 0, %s73
      %s88 = sphi 0, %s74
      %s92 = sphi 0, %s92
      %s94 = sphi 0, %s92
      %s95 = sphi 0, %s94
      %s109 = sphi 0, %s95
      %s113 = sphi 0, %s113
      %s115 = sphi 0, %s113
      %s116 = sphi 0, %s115
      %s130 = sphi 0, %s116
      %s134 = sphi 0, %s134
      %s136 = sphi 0, %s134
      %s137 = sphi 0, %s136
      %s151 = sphi 0, %s137
      %s155 = sphi 0, %s155
      %s157 = sphi 0, %s155
      %s158 = sphi 0, %s157
      %s172 = sphi 0, %s158
      %s176 = sphi 0, %s176
      %s178 = sphi 0, %s176
      %s179 = sphi 0, %s178
      %s193 = sphi 0, %s179
      %s197 = sphi 0, %s197
      %s199 = sphi 0, %s197
      %s200 = sphi 0, %s199
      %s214 = sphi 0, %s200
      %s218 = sphi 0, %s218
      %s220 = sphi 0, %s218
      %s221 = sphi 0, %s220
      %s235 = sphi 0, %s221
      %s239 = sphi 0, %s239
      %s241 = sphi 0, %s239
      %s242 = sphi 0, %s241
      %s256 = sphi 0, %s242
      %s260 = sphi 0, %s260
      %s262 = sphi 0, %s260
      %s263 = sphi 0, %s262
      %s277 = sphi 0, %s263
      %s281 = sphi 0, %s281
      %s283 = sphi 0, %s281
      %s284 = sphi 0, %s283
      %s298 = sphi 0, %s284
      %s304 = sphi 0, %s306
      %s307 = sphi 0, %s304
      %s308 = sphi 0, %s307
      %s324 = sphi 0, %s308
    $region4: #{tpu_custom_call.1} parent=1 // loop_header_branch
      %28 = sbr.rel (%p26) target = $region8
    $region5: #{tpu_custom_call.1} parent=1 // loop_body
      %s30 = ssub.s32 %s25, 1
      %s31 = ssub.s32 %s25, 2
      %s38 = sadd.s32 1, %s33
      %p39 = scmp.ge.s32.totalorder %s38, 1
      %s40 = scalar_select %p39, 0, %s38
      %s41 = sadd.s32 1, %s32
      %s42 = scalar_select %p39, %s41, %s32
      %p43 = scmp.ge.s32.totalorder %s42, 2
      %s44 = scalar_select %p43, 0, %s42
      %s45 = ssub.s32 %s32, %s44
      %p46 = scmp.eq.s32.totalorder %s45, 0
      %s48 = sadd.s32 %s47, 1
      %s49 = scalar_select %p46, %s47, %s48
      %p52 = pneg %p46
      %p53 = scmp.eq.s32.totalorder %s25, 1
      %p54 = por %p52, %p53
      %p55 = scmp.ne.s32.totalorder %s47, %s50
      %p56 = scmp.eq.s32.totalorder %s25, 0
      %p57 = por %p55, %p56
      %p58 = scmp.ne.s32.totalorder %s47, %s50
      %p59 = scmp.eq.s32.totalorder %s30, 1
      %p60 = por %p58, %p59
      %p61 = scmp.ne.s32.totalorder %s50, %s51
      %p62 = scmp.eq.s32.totalorder %s30, 0
      %p63 = por %p61, %p62
      %p64 = scmp.ne.s32.totalorder %s50, %s51
      %p65 = scmp.eq.s32.totalorder %s31, 1
      %p66 = por %p64, %p65
      %p68 = scmp.ne.s32.totalorder %s51, %s67
      %p69 = scmp.eq.s32.totalorder %s31, 0
      %p70 = por %p68, %p69
      %s72 = sadd.s32 %s71, 1
      %p75 = scmp.eq.s32.totalorder %s25, 1
      %p76 = scmp.ne.s32.totalorder %s71, %s73
      %p77 = scmp.eq.s32.totalorder %s25, 0
      %p78 = por %p76, %p77
      %p79 = scmp.ne.s32.totalorder %s71, %s73
      %p80 = scmp.eq.s32.totalorder %s30, 1
      %p81 = por %p79, %p80
      %p82 = scmp.ne.s32.totalorder %s73, %s74
      %p83 = scmp.eq.s32.totalorder %s30, 0
      %p84 = por %p82, %p83
      %p85 = scmp.ne.s32.totalorder %s73, %s74
      %p86 = scmp.eq.s32.totalorder %s31, 1
      %p87 = por %p85, %p86
      %p89 = scmp.ne.s32.totalorder %s74, %s88
      %p90 = scmp.eq.s32.totalorder %s31, 0
      %p91 = por %p89, %p90
      %s93 = sadd.s32 %s92, 1
      %p96 = scmp.eq.s32.totalorder %s25, 1
      %p97 = scmp.ne.s32.totalorder %s92, %s94
      %p98 = scmp.eq.s32.totalorder %s25, 0
      %p99 = por %p97, %p98
      %p100 = scmp.ne.s32.totalorder %s92, %s94
      %p101 = scmp.eq.s32.totalorder %s30, 1
      %p102 = por %p100, %p101
      %p103 = scmp.ne.s32.totalorder %s94, %s95
      %p104 = scmp.eq.s32.totalorder %s30, 0
      %p105 = por %p103, %p104
      %p106 = scmp.ne.s32.totalorder %s94, %s95
      %p107 = scmp.eq.s32.totalorder %s31, 1
      %p108 = por %p106, %p107
      %p110 = scmp.ne.s32.totalorder %s95, %s109
      %p111 = scmp.eq.s32.totalorder %s31, 0
      %p112 = por %p110, %p111
      %s114 = sadd.s32 %s113, 1
      %p117 = scmp.eq.s32.totalorder %s25, 1
      %p118 = scmp.ne.s32.totalorder %s113, %s115
      %p119 = scmp.eq.s32.totalorder %s25, 0
      %p120 = por %p118, %p119
      %p121 = scmp.ne.s32.totalorder %s113, %s115
      %p122 = scmp.eq.s32.totalorder %s30, 1
      %p123 = por %p121, %p122
      %p124 = scmp.ne.s32.totalorder %s115, %s116
      %p125 = scmp.eq.s32.totalorder %s30, 0
      %p126 = por %p124, %p125
      %p127 = scmp.ne.s32.totalorder %s115, %s116
      %p128 = scmp.eq.s32.totalorder %s31, 1
      %p129 = por %p127, %p128
      %p131 = scmp.ne.s32.totalorder %s116, %s130
      %p132 = scmp.eq.s32.totalorder %s31, 0
      %p133 = por %p131, %p132
      %s135 = sadd.s32 %s134, 1
      %p138 = scmp.eq.s32.totalorder %s25, 1
      %p139 = scmp.ne.s32.totalorder %s134, %s136
      %p140 = scmp.eq.s32.totalorder %s25, 0
      %p141 = por %p139, %p140
      %p142 = scmp.ne.s32.totalorder %s134, %s136
      %p143 = scmp.eq.s32.totalorder %s30, 1
      %p144 = por %p142, %p143
      %p145 = scmp.ne.s32.totalorder %s136, %s137
      %p146 = scmp.eq.s32.totalorder %s30, 0
      %p147 = por %p145, %p146
      %p148 = scmp.ne.s32.totalorder %s136, %s137
      %p149 = scmp.eq.s32.totalorder %s31, 1
      %p150 = por %p148, %p149
      %p152 = scmp.ne.s32.totalorder %s137, %s151
      %p153 = scmp.eq.s32.totalorder %s31, 0
      %p154 = por %p152, %p153
      %s156 = sadd.s32 %s155, 1
      %p159 = scmp.eq.s32.totalorder %s25, 1
      %p160 = scmp.ne.s32.totalorder %s155, %s157
      %p161 = scmp.eq.s32.totalorder %s25, 0
      %p162 = por %p160, %p161
      %p163 = scmp.ne.s32.totalorder %s155, %s157
      %p164 = scmp.eq.s32.totalorder %s30, 1
      %p165 = por %p163, %p164
      %p166 = scmp.ne.s32.totalorder %s157, %s158
      %p167 = scmp.eq.s32.totalorder %s30, 0
      %p168 = por %p166, %p167
      %p169 = scmp.ne.s32.totalorder %s157, %s158
      %p170 = scmp.eq.s32.totalorder %s31, 1
      %p171 = por %p169, %p170
      %p173 = scmp.ne.s32.totalorder %s158, %s172
      %p174 = scmp.eq.s32.totalorder %s31, 0
      %p175 = por %p173, %p174
      %s177 = sadd.s32 %s176, 1
      %p180 = scmp.eq.s32.totalorder %s25, 1
      %p181 = scmp.ne.s32.totalorder %s176, %s178
      %p182 = scmp.eq.s32.totalorder %s25, 0
      %p183 = por %p181, %p182
      %p184 = scmp.ne.s32.totalorder %s176, %s178
      %p185 = scmp.eq.s32.totalorder %s30, 1
      %p186 = por %p184, %p185
      %p187 = scmp.ne.s32.totalorder %s178, %s179
      %p188 = scmp.eq.s32.totalorder %s30, 0
      %p189 = por %p187, %p188
      %p190 = scmp.ne.s32.totalorder %s178, %s179
      %p191 = scmp.eq.s32.totalorder %s31, 1
      %p192 = por %p190, %p191
      %p194 = scmp.ne.s32.totalorder %s179, %s193
      %p195 = scmp.eq.s32.totalorder %s31, 0
      %p196 = por %p194, %p195
      %s198 = sadd.s32 %s197, 1
      %p201 = scmp.eq.s32.totalorder %s25, 1
      %p202 = scmp.ne.s32.totalorder %s197, %s199
      %p203 = scmp.eq.s32.totalorder %s25, 0
      %p204 = por %p202, %p203
      %p205 = scmp.ne.s32.totalorder %s197, %s199
      %p206 = scmp.eq.s32.totalorder %s30, 1
      %p207 = por %p205, %p206
      %p208 = scmp.ne.s32.totalorder %s199, %s200
      %p209 = scmp.eq.s32.totalorder %s30, 0
      %p210 = por %p208, %p209
      %p211 = scmp.ne.s32.totalorder %s199, %s200
      %p212 = scmp.eq.s32.totalorder %s31, 1
      %p213 = por %p211, %p212
      %p215 = scmp.ne.s32.totalorder %s200, %s214
      %p216 = scmp.eq.s32.totalorder %s31, 0
      %p217 = por %p215, %p216
      %s219 = sadd.s32 %s218, 1
      %p222 = scmp.eq.s32.totalorder %s25, 1
      %p223 = scmp.ne.s32.totalorder %s218, %s220
      %p224 = scmp.eq.s32.totalorder %s25, 0
      %p225 = por %p223, %p224
      %p226 = scmp.ne.s32.totalorder %s218, %s220
      %p227 = scmp.eq.s32.totalorder %s30, 1
      %p228 = por %p226, %p227
      %p229 = scmp.ne.s32.totalorder %s220, %s221
      %p230 = scmp.eq.s32.totalorder %s30, 0
      %p231 = por %p229, %p230
      %p232 = scmp.ne.s32.totalorder %s220, %s221
      %p233 = scmp.eq.s32.totalorder %s31, 1
      %p234 = por %p232, %p233
      %p236 = scmp.ne.s32.totalorder %s221, %s235
      %p237 = scmp.eq.s32.totalorder %s31, 0
      %p238 = por %p236, %p237
      %s240 = sadd.s32 %s239, 1
      %p243 = scmp.eq.s32.totalorder %s25, 1
      %p244 = scmp.ne.s32.totalorder %s239, %s241
      %p245 = scmp.eq.s32.totalorder %s25, 0
      %p246 = por %p244, %p245
      %p247 = scmp.ne.s32.totalorder %s239, %s241
      %p248 = scmp.eq.s32.totalorder %s30, 1
      %p249 = por %p247, %p248
      %p250 = scmp.ne.s32.totalorder %s241, %s242
      %p251 = scmp.eq.s32.totalorder %s30, 0
      %p252 = por %p250, %p251
      %p253 = scmp.ne.s32.totalorder %s241, %s242
      %p254 = scmp.eq.s32.totalorder %s31, 1
      %p255 = por %p253, %p254
      %p257 = scmp.ne.s32.totalorder %s242, %s256
      %p258 = scmp.eq.s32.totalorder %s31, 0
      %p259 = por %p257, %p258
      %s261 = sadd.s32 %s260, 1
      %p264 = scmp.eq.s32.totalorder %s25, 1
      %p265 = scmp.ne.s32.totalorder %s260, %s262
      %p266 = scmp.eq.s32.totalorder %s25, 0
      %p267 = por %p265, %p266
      %p268 = scmp.ne.s32.totalorder %s260, %s262
      %p269 = scmp.eq.s32.totalorder %s30, 1
      %p270 = por %p268, %p269
      %p271 = scmp.ne.s32.totalorder %s262, %s263
      %p272 = scmp.eq.s32.totalorder %s30, 0
      %p273 = por %p271, %p272
      %p274 = scmp.ne.s32.totalorder %s262, %s263
      %p275 = scmp.eq.s32.totalorder %s31, 1
      %p276 = por %p274, %p275
      %p278 = scmp.ne.s32.totalorder %s263, %s277
      %p279 = scmp.eq.s32.totalorder %s31, 0
      %p280 = por %p278, %p279
      %s282 = sadd.s32 %s281, 1
      %p285 = scmp.eq.s32.totalorder %s25, 1
      %p286 = scmp.ne.s32.totalorder %s281, %s283
      %p287 = scmp.eq.s32.totalorder %s25, 0
      %p288 = por %p286, %p287
      %p289 = scmp.ne.s32.totalorder %s281, %s283
      %p290 = scmp.eq.s32.totalorder %s30, 1
      %p291 = por %p289, %p290
      %p292 = scmp.ne.s32.totalorder %s283, %s284
      %p293 = scmp.eq.s32.totalorder %s30, 0
      %p294 = por %p292, %p293
      %p295 = scmp.ne.s32.totalorder %s283, %s284
      %p296 = scmp.eq.s32.totalorder %s31, 1
      %p297 = por %p295, %p296
      %p299 = scmp.ne.s32.totalorder %s284, %s298
      %p300 = scmp.eq.s32.totalorder %s31, 0
      %p301 = por %p299, %p300
      %s302 = ssub.s32 %s32, %s44
      %p303 = scmp.eq.s32.totalorder %s302, 0
      %s305 = sadd.s32 %s304, 1
      %s306 = scalar_select %p303, %s304, %s305
      %p309 = pneg %p303
      %p310 = scmp.eq.s32.totalorder %s25, 1
      %p311 = por %p309, %p310
      %p312 = scmp.ne.s32.totalorder %s304, %s307
      %p313 = scmp.eq.s32.totalorder %s25, 0
      %p314 = por %p312, %p313
      %p315 = scmp.ne.s32.totalorder %s304, %s307
      %p316 = scmp.eq.s32.totalorder %s30, 1
      %p317 = por %p315, %p316
      %p318 = scmp.ne.s32.totalorder %s307, %s308
      %p319 = scmp.eq.s32.totalorder %s30, 0
      %p320 = por %p318, %p319
      %p321 = scmp.ne.s32.totalorder %s307, %s308
      %p322 = scmp.eq.s32.totalorder %s31, 1
      %p323 = por %p321, %p322
      %p325 = scmp.ne.s32.totalorder %s308, %s324
      %p326 = scmp.eq.s32.totalorder %s31, 0
      %p327 = por %p325, %p326
      %p328 = scmp.le.s32.totalorder 1, %s25
      %p329 = scmp.lt.s32.totalorder %s25, 3
      %p330 = pnand %p328, %p329
      %p331 = pneg %p330
      // Predicated region
      $region9: #{tpu_custom_call.1} parent=5 // pred_check
        _
      $region10: #{tpu_custom_call.1} parent=5 // pred_check_branch
        %333 = sbr.rel (%p330) target = $region12
      $region11: #{tpu_custom_call.1} parent=5 // pred_region
        %s334 = ssub.s32 %s25, 1
        // Predicated region
        $region13: #{tpu_custom_call.1} parent=11 // pred_check
          %p335 = pneg %p84
        $region14: #{tpu_custom_call.1} parent=11 // pred_check_branch
          %337 = sbr.rel (%p335) target = $region16
        $region15: #{tpu_custom_call.1} parent=11 // pred_region
          %339 = vsyncadd [#allocation9], 0
          %s341 = sshll.u32 %s1, 4
          %s342 = int_to_ptr.hbm [resolvable:$true] %s341
          %s343 = sshll.u32 [#allocation8], 4
          %s344 = int_to_ptr.vmem [resolvable:$true] %s343
          %346 = dma.hbm_to_vmem [thread:$0]  %s342, 128, %s344, [#allocation9]
        $region16: #{tpu_custom_call.1} parent=11 // pred_fallthru
          _
        // Predicated region
        $region17: #{tpu_custom_call.1} parent=11 // pred_check
          %p347 = pneg %p105
        $region18: #{tpu_custom_call.1} parent=11 // pred_check_branch
          %349 = sbr.rel (%p347) target = $region20
        $region19: #{tpu_custom_call.1} parent=11 // pred_region
          _
        $region20: #{tpu_custom_call.1} parent=11 // pred_fallthru
          _
        // Predicated region
        $region21: #{tpu_custom_call.1} parent=11 // pred_check
          %p350 = pneg %p126
        $region22: #{tpu_custom_call.1} parent=11 // pred_check_branch
          %352 = sbr.rel (%p350) target = $region24
        $region23: #{tpu_custom_call.1} parent=11 // pred_region
          _
        $region24: #{tpu_custom_call.1} parent=11 // pred_fallthru
          _
        // Predicated region
        $region25: #{tpu_custom_call.1} parent=11 // pred_check
          %p353 = pneg %p147
        $region26: #{tpu_custom_call.1} parent=11 // pred_check_branch
          %355 = sbr.rel (%p353) target = $region28
        $region27: #{tpu_custom_call.1} parent=11 // pred_region
          _
        $region28: #{tpu_custom_call.1} parent=11 // pred_fallthru
          _
        // Predicated region
        $region29: #{tpu_custom_call.1} parent=11 // pred_check
          %p356 = pneg %p168
        $region30: #{tpu_custom_call.1} parent=11 // pred_check_branch
          %358 = sbr.rel (%p356) target = $region32
        $region31: #{tpu_custom_call.1} parent=11 // pred_region
          _
        $region32: #{tpu_custom_call.1} parent=11 // pred_fallthru
          _
        // Predicated region
        $region33: #{tpu_custom_call.1} parent=11 // pred_check
          %p359 = pneg %p189
        $region34: #{tpu_custom_call.1} parent=11 // pred_check_branch
          %361 = sbr.rel (%p359) target = $region36
        $region35: #{tpu_custom_call.1} parent=11 // pred_region
          _
        $region36: #{tpu_custom_call.1} parent=11 // pred_fallthru
          _
        // Predicated region
        $region37: #{tpu_custom_call.1} parent=11 // pred_check
          %p362 = pneg %p210
        $region38: #{tpu_custom_call.1} parent=11 // pred_check_branch
          %364 = sbr.rel (%p362) target = $region40
        $region39: #{tpu_custom_call.1} parent=11 // pred_region
          _
        $region40: #{tpu_custom_call.1} parent=11 // pred_fallthru
          _
        // Predicated region
        $region41: #{tpu_custom_call.1} parent=11 // pred_check
          %p365 = pneg %p231
        $region42: #{tpu_custom_call.1} parent=11 // pred_check_branch
          %367 = sbr.rel (%p365) target = $region44
        $region43: #{tpu_custom_call.1} parent=11 // pred_region
          _
        $region44: #{tpu_custom_call.1} parent=11 // pred_fallthru
          _
        // Predicated region
        $region45: #{tpu_custom_call.1} parent=11 // pred_check
          %p368 = pneg %p252
        $region46: #{tpu_custom_call.1} parent=11 // pred_check_branch
          %370 = sbr.rel (%p368) target = $region48
        $region47: #{tpu_custom_call.1} parent=11 // pred_region
          _
        $region48: #{tpu_custom_call.1} parent=11 // pred_fallthru
          _
        // Predicated region
        $region49: #{tpu_custom_call.1} parent=11 // pred_check
          %p371 = pneg %p273
        $region50: #{tpu_custom_call.1} parent=11 // pred_check_branch
          %373 = sbr.rel (%p371) target = $region52
        $region51: #{tpu_custom_call.1} parent=11 // pred_region
          _
        $region52: #{tpu_custom_call.1} parent=11 // pred_fallthru
          _
        // Predicated region
        $region53: #{tpu_custom_call.1} parent=11 // pred_check
          %p374 = pneg %p294
        $region54: #{tpu_custom_call.1} parent=11 // pred_check_branch
          %376 = sbr.rel (%p374) target = $region56
        $region55: #{tpu_custom_call.1} parent=11 // pred_region
          _
        $region56: #{tpu_custom_call.1} parent=11 // pred_fallthru
          _
      $region12: #{tpu_custom_call.1} parent=5 // pred_fallthru
        _
      %p377 = scmp.lt.s32.totalorder %s25, 2
      // Predicated region
      $region57: #{tpu_custom_call.1} parent=5 // pred_check
        %p378 = pneg %p377
      $region58: #{tpu_custom_call.1} parent=5 // pred_check_branch
        %380 = sbr.rel (%p378) target = $region60
      $region59: #{tpu_custom_call.1} parent=5 // pred_region
        // Predicated region
        $region61: #{tpu_custom_call.1} parent=59 // pred_check
          %p381 = pneg %p57
        $region62: #{tpu_custom_call.1} parent=59 // pred_check_branch
          %383 = sbr.rel (%p381) target = $region64
        $region63: #{tpu_custom_call.1} parent=59 // pred_region
          %s384 = sand.u32 %s47, 1
          %s385 = scalar_lea.sflag [#allocation6], %s384
          %s386 = sand.u32 %s47, 1
          %s387 = smul.addr %s386, 4
          %s388 = scalar_lea.vmem [#allocation5], %s387
          %390 = vsyncadd %s385, 0
          %s391 = smul.addr %s32, 4
          %s392 = scalar_lea.hbm %s0, %s391
          %s394 = sshll.u32 %s392, 4
          %s395 = int_to_ptr.hbm [resolvable:$true] %s394
          %s396 = sshll.u32 %s388, 4
          %s397 = int_to_ptr.vmem [resolvable:$true] %s396
          %399 = dma.hbm_to_vmem [thread:$0]  %s395, 64, %s397, %s385
        $region64: #{tpu_custom_call.1} parent=59 // pred_fallthru
          _
      $region60: #{tpu_custom_call.1} parent=5 // pred_fallthru
        _
      %p400 = scmp.le.s32.totalorder 1, %s25
      %p401 = scmp.lt.s32.totalorder %s25, 3
      %p402 = pnand %p400, %p401
      %p403 = pneg %p402
      // Predicated region
      $region65: #{tpu_custom_call.1} parent=5 // pred_check
        _
      $region66: #{tpu_custom_call.1} parent=5 // pred_check_branch
        %405 = sbr.rel (%p402) target = $region68
      $region67: #{tpu_custom_call.1} parent=5 // pred_region
        %s406 = ssub.s32 %s25, 1
        %s407 = sand.u32 %s50, 1
        %s408 = scalar_lea.sflag [#allocation6], %s407
        %s409 = sand.u32 %s50, 1
        %s410 = smul.addr %s409, 4
        %s411 = scalar_lea.vmem [#allocation5], %s410
        // Predicated region
        $region69: #{tpu_custom_call.1} parent=67 // pred_check
          %p412 = pneg %p63
        $region70: #{tpu_custom_call.1} parent=67 // pred_check_branch
          %414 = sbr.rel (%p412) target = $region72
        $region71: #{tpu_custom_call.1} parent=67 // pred_region
          %416 = dma.done %s408, 64
        $region72: #{tpu_custom_call.1} parent=67 // pred_fallthru
          _
        // Predicated region
        $region73: #{tpu_custom_call.1} parent=67 // pred_check
          %p417 = pneg %p84
        $region74: #{tpu_custom_call.1} parent=67 // pred_check_branch
          %419 = sbr.rel (%p417) target = $region76
        $region75: #{tpu_custom_call.1} parent=67 // pred_region
          %421 = dma.done [#allocation9], 128
        $region76: #{tpu_custom_call.1} parent=67 // pred_fallthru
          _
        %s422 = sand.u32 %s50, 1
        %s423 = scalar_lea.sflag [#allocation6], %s422
        %s424 = sand.u32 %s50, 1
        %s425 = smul.addr %s424, 4
        %s426 = scalar_lea.vmem [#allocation5], %s425
        %p427 = pneg %p63
        %p428 = pneg %p60
        %p429 = pneg %p84
        %p430 = pneg %p81
        %p431 = pneg %p105
        %p432 = pneg %p102
        %p433 = pneg %p126
        %p434 = pneg %p123
        %p435 = pneg %p147
        %p436 = pneg %p144
        %p437 = pneg %p168
        %p438 = pneg %p165
        %p439 = pneg %p189
        %p440 = pneg %p186
        %p441 = pneg %p210
        %p442 = pneg %p207
        %p443 = pneg %p231
        %p444 = pneg %p228
        %p445 = pneg %p252
        %p446 = pneg %p249
        %p447 = pneg %p273
        %p448 = pneg %p270
        %p449 = pneg %p294
        %p450 = pneg %p291
        %p451 = pneg %p320
        %p452 = pneg %p317
        %s453 = sand.u32 %s307, 1
        %s454 = scalar_lea.sflag [#allocation7], %s453
        %s455 = sand.u32 %s307, 1
        %s456 = smul.addr %s455, 4
        %s457 = scalar_lea.vmem [#allocation10], %s456
        %p459 = scmp.eq.s32.totalorder %s35, 0
        // Predicated region
        $region77: #{tpu_custom_call.1} parent=67 // pred_check
          %p460 = pneg %p459
        $region78: #{tpu_custom_call.1} parent=67 // pred_check_branch
          %462 = sbr.rel (%p460) target = $region80
        $region79: #{tpu_custom_call.1} parent=67 // pred_region
          %v463 = vld [vmem:[%s411] sm:$0xf]
          %v464 = vld [vmem:[%s2] sm:$0xf]
          %v465 = vld [vmem:[%s2 + $0x4] sm:$0xf]
          %v466 = vld [vmem:[%s2 + $0x8] sm:$0xf]
          %v467 = vld [vmem:[%s2 + $0xc] sm:$0xf]
          %v468 = vld [vmem:[%s3] sm:$0x1]
          %v470 = vperm.slane %v468, 0
          %v476 = vunpack.c.l.b16 %v464
          %v477 = vunpack.c.l.b16 %v465
          %v478 = vunpack.c.l.b16 %v466
          %v479 = vunpack.c.l.b16 %v467
          %v480 = vpack.c.b16 %v477, %v476
          %v481 = vpack.c.b16 %v479, %v478
          %vm484 = vcmask 261120
          %v486 = vsel %vm484, %v463, 0
          %488 = vmatpush.bf16.msra.mxu0 0
          %489 = vmatpush.bf16.msra.mxu0 0
          %490 = vmatpush.bf16.msra.mxu0 0
          %491 = vmatpush.bf16.msra.mxu0 0
          %492 = vmatpush.bf16.msra.mxu0 0
          %493 = vmatpush.bf16.msra.mxu0 0
          %494 = vmatpush.bf16.msra.mxu0 %v481
          %495 = vmatpush.bf16.msra.mxu0 %v480
          %496 = vmatmul.bf16.gmra.mxu0 %v486
          %v497 = vpop.f32.mrf.mxu0
          %v498 = vadd.f32 %v470, %v497
          %v499 = vpop.f32.mrf.mxu0
          %500 = vdwg.mxu0
          %v501 = vpack.c.bf16 %v498, %v498
          %v502 = vld [vmem:[#allocation8] sm:$0xff]
          %v504 = vunpack.c.l.b16 %v501
          %v505 = vpack.c.b16 %v504, %v504
          %506 = vrot.lane.b32.xlu0 %v505, 96
          %v507 = vpop.permute.xlu0 %506
          %vm508 = vcmask 64512
          %v510 = vsel %vm508, %v501, 0
          %v513 = vsel %vm508, %v507, 0
          %515 = vmatpush.bf16.xpose.msra.mxu0 0
          %516 = vmatpush.bf16.xpose.msra.mxu0 0
          %517 = vmatpush.bf16.xpose.msra.mxu0 0
          %518 = vmatpush.bf16.xpose.msra.mxu0 0
          %519 = vmatpush.bf16.xpose.msra.mxu0 0
          %520 = vmatpush.bf16.xpose.msra.mxu0 0
          %521 = vmatpush.bf16.xpose.msra.mxu0 0
          %522 = vmatpush.bf16.xpose.msra.mxu0 %v513
          %523 = vmatmul.bf16.gmra.mxu0 %v510
          %v524 = vpop.f32.mrf.mxu0
          %v525 = vadd.f32 %v502, %v524
          %v526 = vpop.f32.mrf.mxu0
          %527 = vdwg.mxu0
          %v528 = vsel %vm508, %v525, -inf
          %529 = vmax.xlane.f32.xlu0 %v528
          %v530 = vpop.xlane.xlu0 %529
          %v531 = vsub.f32 %v525, %v530
          %v532 = vmul.f32 %v531, 1.442695
          %v533 = vpow.pop %v532
          %v534 = vsel %vm508, %v533, 0.0
          %535 = vadd.xlane.f32.xlu0 %v534
          %v536 = vpop.xlane.xlu0 %535
          %v537 = vpack.c.bf16 %v533, %v533
          %538 = vrot.lane.b32.xlu0 %v505, 64
          %v539 = vpop.permute.xlu0 %538
          %v541 = vsel %vm508, %v537, 0
          %vm543 = vcmask 1043456
          %v545 = vsel %vm543, %v539, 0
          %547 = vmatpush.bf16.msra.mxu0 0
          %548 = vmatpush.bf16.msra.mxu0 0
          %549 = vmatpush.bf16.msra.mxu0 0
          %550 = vmatpush.bf16.msra.mxu0 0
          %551 = vmatpush.bf16.msra.mxu0 0
          %552 = vmatpush.bf16.msra.mxu0 0
          %553 = vmatpush.bf16.msra.mxu0 0
          %554 = vmatpush.bf16.msra.mxu0 %v545
          %555 = vmatmul.bf16.gmra.mxu0 %v541
          %v556 = vpop.f32.mrf.mxu0
          %v557 = vadd.f32 0.0, %v556
          %v558 = vpop.f32.mrf.mxu0
          %559 = vdwg.mxu0
          %v560 = vrcp.pop %v536
          %v561 = vmul.f32 %v557, %v560
          %v562 = vpack.c.bf16 %v561, %v561
          %vm563 = vcmask 60416
          %564 = vst.msk [vmem:[#allocation2] sm:$0xf] %vm563, %v562
          %565 = vrot.lane.b32.xlu0 %v505, 120
          %v566 = vpop.permute.xlu0 %565
          %567 = vrot.lane.b32.xlu0 %v505, 88
          %v568 = vpop.permute.xlu0 %567
          %v570 = vsel %vm508, %v566, 0
          %v573 = vsel %vm508, %v568, 0
          %575 = vmatpush.bf16.xpose.msra.mxu0 0
          %576 = vmatpush.bf16.xpose.msra.mxu0 0
          %577 = vmatpush.bf16.xpose.msra.mxu0 0
          %578 = vmatpush.bf16.xpose.msra.mxu0 0
          %579 = vmatpush.bf16.xpose.msra.mxu0 0
          %580 = vmatpush.bf16.xpose.msra.mxu0 0
          %581 = vmatpush.bf16.xpose.msra.mxu0 0
          %582 = vmatpush.bf16.xpose.msra.mxu0 %v573
          %583 = vmatmul.bf16.gmra.mxu0 %v570
          %v584 = vpop.f32.mrf.mxu0
          %v585 = vadd.f32 %v502, %v584
          %v586 = vpop.f32.mrf.mxu0
          %587 = vdwg.mxu0
          %v588 = vsel %vm508, %v585, -inf
          %589 = vmax.xlane.f32.xlu0 %v588
          %v590 = vpop.xlane.xlu0 %589
          %v591 = vsub.f32 %v585, %v590
          %v592 = vmul.f32 %v591, 1.442695
          %v593 = vpow.pop %v592
          %v594 = vsel %vm508, %v593, 0.0
          %595 = vadd.xlane.f32.xlu0 %v594
          %v596 = vpop.xlane.xlu0 %595
          %v597 = vpack.c.bf16 %v593, %v593
          %598 = vrot.lane.b32.xlu0 %v505, 56
          %v599 = vpop.permute.xlu0 %598
          %v601 = vsel %vm508, %v597, 0
          %v604 = vsel %vm543, %v599, 0
          %606 = vmatpush.bf16.msra.mxu0 0
          %607 = vmatpush.bf16.msra.mxu0 0
          %608 = vmatpush.bf16.msra.mxu0 0
          %609 = vmatpush.bf16.msra.mxu0 0
          %610 = vmatpush.bf16.msra.mxu0 0
          %611 = vmatpush.bf16.msra.mxu0 0
          %612 = vmatpush.bf16.msra.mxu0 0
          %613 = vmatpush.bf16.msra.mxu0 %v604
          %614 = vmatmul.bf16.gmra.mxu0 %v601
          %v615 = vpop.f32.mrf.mxu0
          %v616 = vadd.f32 0.0, %v615
          %v617 = vpop.f32.mrf.mxu0
          %618 = vdwg.mxu0
          %v619 = vrcp.pop %v596
          %v620 = vmul.f32 %v616, %v619
          %v621 = vpack.c.bf16 %v620, %v620
          %623 = vrot.lane.b32.xlu0 %v621, 8
          %v624 = vpop.permute.xlu0 %623
          %vm626 = vcmask 126016
          %627 = vst.msk [vmem:[#allocation2] sm:$0xf] %vm626, %v624
          %628 = vrot.lane.b32.xlu0 %v505, 112
          %v629 = vpop.permute.xlu0 %628
          %630 = vrot.lane.b32.xlu0 %v505, 80
          %v631 = vpop.permute.xlu0 %630
          %v633 = vsel %vm508, %v629, 0
          %v636 = vsel %vm508, %v631, 0
          %638 = vmatpush.bf16.xpose.msra.mxu0 0
          %639 = vmatpush.bf16.xpose.msra.mxu0 0
          %640 = vmatpush.bf16.xpose.msra.mxu0 0
          %641 = vmatpush.bf16.xpose.msra.mxu0 0
          %642 = vmatpush.bf16.xpose.msra.mxu0 0
          %643 = vmatpush.bf16.xpose.msra.mxu0 0
          %644 = vmatpush.bf16.xpose.msra.mxu0 0
          %645 = vmatpush.bf16.xpose.msra.mxu0 %v636
          %646 = vmatmul.bf16.gmra.mxu0 %v633
          %v647 = vpop.f32.mrf.mxu0
          %v648 = vadd.f32 %v502, %v647
          %v649 = vpop.f32.mrf.mxu0
          %650 = vdwg.mxu0
          %v651 = vsel %vm508, %v648, -inf
          %652 = vmax.xlane.f32.xlu0 %v651
          %v653 = vpop.xlane.xlu0 %652
          %v654 = vsub.f32 %v648, %v653
          %v655 = vmul.f32 %v654, 1.442695
          %v656 = vpow.pop %v655
          %v657 = vsel %vm508, %v656, 0.0
          %658 = vadd.xlane.f32.xlu0 %v657
          %v659 = vpop.xlane.xlu0 %658
          %v660 = vpack.c.bf16 %v656, %v656
          %661 = vrot.lane.b32.xlu0 %v505, 48
          %v662 = vpop.permute.xlu0 %661
          %v664 = vsel %vm508, %v660, 0
          %v667 = vsel %vm543, %v662, 0
          %669 = vmatpush.bf16.msra.mxu0 0
          %670 = vmatpush.bf16.msra.mxu0 0
          %671 = vmatpush.bf16.msra.mxu0 0
          %672 = vmatpush.bf16.msra.mxu0 0
          %673 = vmatpush.bf16.msra.mxu0 0
          %674 = vmatpush.bf16.msra.mxu0 0
          %675 = vmatpush.bf16.msra.mxu0 0
          %676 = vmatpush.bf16.msra.mxu0 %v667
          %677 = vmatmul.bf16.gmra.mxu0 %v664
          %v678 = vpop.f32.mrf.mxu0
          %v679 = vadd.f32 0.0, %v678
          %v680 = vpop.f32.mrf.mxu0
          %681 = vdwg.mxu0
          %v682 = vrcp.pop %v659
          %v683 = vmul.f32 %v679, %v682
          %v684 = vpack.c.bf16 %v683, %v683
          %686 = vrot.lane.b32.xlu0 %v684, 16
          %v687 = vpop.permute.xlu0 %686
          %vm689 = vcmask 191616
          %690 = vst.msk [vmem:[#allocation2] sm:$0xf] %vm689, %v687
          %691 = vrot.lane.b32.xlu0 %v505, 104
          %v692 = vpop.permute.xlu0 %691
          %693 = vrot.lane.b32.xlu0 %v505, 72
          %v694 = vpop.permute.xlu0 %693
          %v696 = vsel %vm508, %v692, 0
          %v699 = vsel %vm508, %v694, 0
          %701 = vmatpush.bf16.xpose.msra.mxu0 0
          %702 = vmatpush.bf16.xpose.msra.mxu0 0
          %703 = vmatpush.bf16.xpose.msra.mxu0 0
          %704 = vmatpush.bf16.xpose.msra.mxu0 0
          %705 = vmatpush.bf16.xpose.msra.mxu0 0
          %706 = vmatpush.bf16.xpose.msra.mxu0 0
          %707 = vmatpush.bf16.xpose.msra.mxu0 0
          %708 = vmatpush.bf16.xpose.msra.mxu0 %v699
          %709 = vmatmul.bf16.gmra.mxu0 %v696
          %v710 = vpop.f32.mrf.mxu0
          %v711 = vadd.f32 %v502, %v710
          %v712 = vpop.f32.mrf.mxu0
          %713 = vdwg.mxu0
          %v714 = vsel %vm508, %v711, -inf
          %715 = vmax.xlane.f32.xlu0 %v714
          %v716 = vpop.xlane.xlu0 %715
          %v717 = vsub.f32 %v711, %v716
          %v718 = vmul.f32 %v717, 1.442695
          %v719 = vpow.pop %v718
          %v720 = vsel %vm508, %v719, 0.0
          %721 = vadd.xlane.f32.xlu0 %v720
          %v722 = vpop.xlane.xlu0 %721
          %v723 = vpack.c.bf16 %v719, %v719
          %724 = vrot.lane.b32.xlu0 %v505, 40
          %v725 = vpop.permute.xlu0 %724
          %v727 = vsel %vm508, %v723, 0
          %v730 = vsel %vm543, %v725, 0
          %732 = vmatpush.bf16.msra.mxu0 0
          %733 = vmatpush.bf16.msra.mxu0 0
          %734 = vmatpush.bf16.msra.mxu0 0
          %735 = vmatpush.bf16.msra.mxu0 0
          %736 = vmatpush.bf16.msra.mxu0 0
          %737 = vmatpush.bf16.msra.mxu0 0
          %738 = vmatpush.bf16.msra.mxu0 0
          %739 = vmatpush.bf16.msra.mxu0 %v730
          %740 = vmatmul.bf16.gmra.mxu0 %v727
          %v741 = vpop.f32.mrf.mxu0
          %v742 = vadd.f32 0.0, %v741
          %v743 = vpop.f32.mrf.mxu0
          %744 = vdwg.mxu0
          %v745 = vrcp.pop %v722
          %v746 = vmul.f32 %v742, %v745
          %v747 = vpack.c.bf16 %v746, %v746
          %749 = vrot.lane.b32.xlu0 %v747, 24
          %v750 = vpop.permute.xlu0 %749
          %vm752 = vcmask 257216
          %753 = vst.msk [vmem:[#allocation2] sm:$0xf] %vm752, %v750
          %v754 = vld [vmem:[#allocation2] sm:$0xf]
          %v755 = vld [vmem:[%s4] sm:$0xf]
          %v756 = vld [vmem:[%s4 + $0x4] sm:$0xf]
          %v757 = vld [vmem:[%s4 + $0x8] sm:$0xf]
          %v758 = vld [vmem:[%s4 + $0xc] sm:$0xf]
          %v759 = vld [vmem:[%s5] sm:$0x1]
          %v761 = vperm.slane %v759, 0
          %v767 = vunpack.c.l.b16 %v755
          %v768 = vunpack.c.l.b16 %v756
          %v769 = vunpack.c.l.b16 %v757
          %v770 = vunpack.c.l.b16 %v758
          %v771 = vpack.c.b16 %v768, %v767
          %v772 = vpack.c.b16 %v770, %v769
          %v776 = vsel %vm484, %v754, 0
          %778 = vmatpush.bf16.msra.mxu0 0
          %779 = vmatpush.bf16.msra.mxu0 0
          %780 = vmatpush.bf16.msra.mxu0 0
          %781 = vmatpush.bf16.msra.mxu0 0
          %782 = vmatpush.bf16.msra.mxu0 0
          %783 = vmatpush.bf16.msra.mxu0 0
          %784 = vmatpush.bf16.msra.mxu0 %v772
          %785 = vmatpush.bf16.msra.mxu0 %v771
          %786 = vmatmul.bf16.gmra.mxu0 %v776
          %v787 = vpop.f32.mrf.mxu0
          %v788 = vadd.f32 %v761, %v787
          %v789 = vpop.f32.mrf.mxu0
          %790 = vdwg.mxu0
          %v791 = vunpack.c.l.bf16 %v463
          %v792 = vadd.f32 %v791, %v788
          %v793 = vld [vmem:[%s10] sm:$0x1]
          %v794 = vld [vmem:[%s11] sm:$0x1]
          %v795 = vsel %vm484, %v792, 0.0
          %796 = vadd.xlane.f32.xlu0 %v795
          %v797 = vpop.xlane.xlu0 %796
          %v798 = vrcp.pop 32.0
          %v799 = vmul.f32 32.0, %v798
          %v800 = vsub.f32 1.0, %v799
          %v801 = vmul.f32 %v798, %v800
          %v802 = vadd.f32 %v798, %v801
          %vm803 = vweird.f32 %v798
          %v804 = vsel %vm803, %v798, %v802
          %v805 = vmul.f32 %v797, %v804
          %v806 = vsub.f32 %v792, %v805
          %v807 = vmul.f32 %v806, %v806
          %v808 = vsel %vm484, %v807, 0.0
          %809 = vadd.xlane.f32.xlu0 %v808
          %v810 = vpop.xlane.xlu0 %809
          %v811 = vmul.f32 %v810, %v804
          %v812 = vadd.f32 %v811, 1e-05
          %v813 = vrsqrt.pop %v812
          %v814 = vmul.f32 %v813, %v812
          %v815 = vmul.f32 %v814, %v813
          %v816 = vmul.f32 0.5, %v815
          %v817 = vsub.f32 1.5, %v816
          %v818 = vmul.f32 %v813, %v817
          %vm819 = vweird.f32 %v812
          %vm820 = vweird.f32 %v813
          %vm821 = vmor %vm819, %vm820
          %v822 = vsel %vm821, %v813, %v818
          %v823 = vmul.f32 %v806, %v822
          %v825 = vperm.slane %v793, 0
          %v827 = vmul.f32 %v823, %v825
          %v829 = vperm.slane %v794, 0
          %v831 = vadd.f32 %v827, %v829
          %832 = vst.msk [vmem:[#allocation3] sm:$0xff] %vm484, %v831
          %833 = vst.msk [vmem:[#allocation4] sm:$0xff] %vm484, 0.0
        $region80: #{tpu_custom_call.1} parent=67 // pred_fallthru
          _
        %v834 = vld [vmem:[#allocation3] sm:$0xff]
        %v835 = vpack.c.bf16 %v834, %v834
        %v836 = vld [vmem:[%s6] sm:$0xf]
        %v837 = vld [vmem:[%s6 + $0x4] sm:$0xf]
        %v838 = vld [vmem:[%s6 + $0x8] sm:$0xf]
        %v839 = vld [vmem:[%s6 + $0xc] sm:$0xf]
        %v840 = vld [vmem:[%s7] sm:$0x1]
        %v842 = vperm.slane %v840, 0
        %v848 = vunpack.c.l.b16 %v836
        %v849 = vunpack.c.l.b16 %v837
        %v850 = vunpack.c.l.b16 %v838
        %v851 = vunpack.c.l.b16 %v839
        %v852 = vpack.c.b16 %v849, %v848
        %v853 = vpack.c.b16 %v851, %v850
        %vm856 = vcmask 261120
        %v858 = vsel %vm856, %v835, 0
        %860 = vmatpush.bf16.msra.mxu0 0
        %861 = vmatpush.bf16.msra.mxu0 0
        %862 = vmatpush.bf16.msra.mxu0 0
        %863 = vmatpush.bf16.msra.mxu0 0
        %864 = vmatpush.bf16.msra.mxu0 0
        %865 = vmatpush.bf16.msra.mxu0 0
        %866 = vmatpush.bf16.msra.mxu0 %v853
        %867 = vmatpush.bf16.msra.mxu0 %v852
        %868 = vmatmul.bf16.gmra.mxu0 %v858
        %v869 = vpop.f32.mrf.mxu0
        %v870 = vadd.f32 %v842, %v869
        %v871 = vpop.f32.mrf.mxu0
        %872 = vdwg.mxu0
        %v873 = vmax.f32 %v870, 0.0
        %v874 = vpack.c.bf16 %v873, %v873
        %v875 = vld [vmem:[#allocation4] sm:$0xff]
        %v876 = vld [vmem:[%s8] sm:$0xf]
        %v877 = vld [vmem:[%s8 + $0x4] sm:$0xf]
        %v878 = vld [vmem:[%s8 + $0x8] sm:$0xf]
        %v879 = vld [vmem:[%s8 + $0xc] sm:$0xf]
        %v880 = vld [vmem:[%s8 + $0x10] sm:$0xf]
        %v881 = vld [vmem:[%s8 + $0x14] sm:$0xf]
        %v882 = vld [vmem:[%s8 + $0x18] sm:$0xf]
        %v883 = vld [vmem:[%s8 + $0x1c] sm:$0xf]
        %v892 = vunpack.c.l.b16 %v876
        %v893 = vunpack.c.l.b16 %v877
        %v894 = vunpack.c.l.b16 %v878
        %v895 = vunpack.c.l.b16 %v879
        %v896 = vunpack.c.l.b16 %v880
        %v897 = vunpack.c.l.b16 %v881
        %v898 = vunpack.c.l.b16 %v882
        %v899 = vunpack.c.l.b16 %v883
        %v900 = vpack.c.b16 %v893, %v892
        %v901 = vpack.c.b16 %v895, %v894
        %v902 = vpack.c.b16 %v897, %v896
        %v903 = vpack.c.b16 %v899, %v898
        %vm908 = vcmask 523264
        %v910 = vsel %vm908, %v874, 0
        %912 = vmatpush.bf16.msra.mxu0 0
        %913 = vmatpush.bf16.msra.mxu0 0
        %914 = vmatpush.bf16.msra.mxu0 0
        %915 = vmatpush.bf16.msra.mxu0 0
        %916 = vmatpush.bf16.msra.mxu0 %v903
        %917 = vmatpush.bf16.msra.mxu0 %v902
        %918 = vmatpush.bf16.msra.mxu0 %v901
        %919 = vmatpush.bf16.msra.mxu0 %v900
        %920 = vmatmul.bf16.gmra.mxu0 %v910
        %v921 = vpop.f32.mrf.mxu0
        %v922 = vadd.f32 0.0, %v921
        %v923 = vpop.f32.mrf.mxu0
        %924 = vdwg.mxu0
        %v925 = vadd.f32 %v875, %v922
        %926 = vst.msk [vmem:[#allocation4] sm:$0xff] %vm856, %v925
        // Predicated region
        $region81: #{tpu_custom_call.1} parent=67 // pred_check
          %p927 = pneg %p459
        $region82: #{tpu_custom_call.1} parent=67 // pred_check_branch
          %929 = sbr.rel (%p927) target = $region84
        $region83: #{tpu_custom_call.1} parent=67 // pred_region
          %v930 = vld [vmem:[#allocation4] sm:$0xff]
          %v931 = vld [vmem:[%s9] sm:$0x1]
          %v933 = vperm.slane %v931, 0
          %v935 = vadd.f32 %v930, %v933
          %v936 = vld [vmem:[#allocation3] sm:$0xff]
          %v937 = vadd.f32 %v936, %v935
          %v938 = vld [vmem:[%s10] sm:$0x1]
          %v939 = vld [vmem:[%s11] sm:$0x1]
          %v940 = vsel %vm856, %v937, 0.0
          %941 = vadd.xlane.f32.xlu0 %v940
          %v942 = vpop.xlane.xlu0 %941
          %v943 = vrcp.pop 32.0
          %v944 = vmul.f32 32.0, %v943
          %v945 = vsub.f32 1.0, %v944
          %v946 = vmul.f32 %v943, %v945
          %v947 = vadd.f32 %v943, %v946
          %vm948 = vweird.f32 %v943
          %v949 = vsel %vm948, %v943, %v947
          %v950 = vmul.f32 %v942, %v949
          %v951 = vsub.f32 %v937, %v950
          %v952 = vmul.f32 %v951, %v951
          %v953 = vsel %vm856, %v952, 0.0
          %954 = vadd.xlane.f32.xlu0 %v953
          %v955 = vpop.xlane.xlu0 %954
          %v956 = vmul.f32 %v955, %v949
          %v957 = vadd.f32 %v956, 1e-05
          %v958 = vrsqrt.pop %v957
          %v959 = vmul.f32 %v958, %v957
          %v960 = vmul.f32 %v959, %v958
          %v961 = vmul.f32 0.5, %v960
          %v962 = vsub.f32 1.5, %v961
          %v963 = vmul.f32 %v958, %v962
          %vm964 = vweird.f32 %v957
          %vm965 = vweird.f32 %v958
          %vm966 = vmor %vm964, %vm965
          %v967 = vsel %vm966, %v958, %v963
          %v968 = vmul.f32 %v951, %v967
          %v970 = vperm.slane %v938, 0
          %v972 = vmul.f32 %v968, %v970
          %v974 = vperm.slane %v939, 0
          %v976 = vadd.f32 %v972, %v974
          %v977 = vpack.c.bf16 %v976, %v976
          %vm978 = vcmask 257024
          %979 = vst.msk [vmem:[%s457] sm:$0xf] %vm978, %v977
        $region84: #{tpu_custom_call.1} parent=67 // pred_fallthru
          _
        %s980 = sand.u32 %s307, 1
        %s981 = scalar_lea.sflag [#allocation7], %s980
        %s982 = sand.u32 %s307, 1
        %s983 = smul.addr %s982, 4
        %s984 = scalar_lea.vmem [#allocation10], %s983
        // Predicated region
        $region85: #{tpu_custom_call.1} parent=67 // pred_check
          %p985 = pneg %p317
        $region86: #{tpu_custom_call.1} parent=67 // pred_check_branch
          %987 = sbr.rel (%p985) target = $region88
        $region87: #{tpu_custom_call.1} parent=67 // pred_region
          %989 = vsyncadd %s981, 0
          %s990 = smul.addr %s34, 4
          %s991 = scalar_lea.hbm %s12, %s990
          %s993 = sshll.u32 %s984, 4
          %s994 = int_to_ptr.vmem [resolvable:$true] %s993
          %s995 = sshll.u32 %s991, 4
          %s996 = int_to_ptr.hbm [resolvable:$true] %s995
          %998 = dma.vmem_to_hbm [thread:$0]  %s994, 64, %s996, %s981
        $region88: #{tpu_custom_call.1} parent=67 // pred_fallthru
          _
      $region68: #{tpu_custom_call.1} parent=5 // pred_fallthru
        _
      %p999 = scmp.le.s32.totalorder 2, %s25
      // Predicated region
      $region89: #{tpu_custom_call.1} parent=5 // pred_check
        %p1000 = pneg %p999
      $region90: #{tpu_custom_call.1} parent=5 // pred_check_branch
        %1002 = sbr.rel (%p1000) target = $region92
      $region91: #{tpu_custom_call.1} parent=5 // pred_region
        %s1003 = ssub.s32 %s25, 2
        // Predicated region
        $region93: #{tpu_custom_call.1} parent=91 // pred_check
          %p1004 = pneg %p323
        $region94: #{tpu_custom_call.1} parent=91 // pred_check_branch
          %1006 = sbr.rel (%p1004) target = $region96
        $region95: #{tpu_custom_call.1} parent=91 // pred_region
          %s1007 = sand.u32 %s308, 1
          %s1008 = scalar_lea.sflag [#allocation7], %s1007
          %s1009 = sand.u32 %s308, 1
          %s1010 = smul.addr %s1009, 4
          %s1011 = scalar_lea.vmem [#allocation10], %s1010
          %1013 = dma.done %s1008, 64
        $region96: #{tpu_custom_call.1} parent=91 // pred_fallthru
          _
      $region92: #{tpu_custom_call.1} parent=5 // pred_fallthru
        _
    $region6: #{tpu_custom_call.1} parent=1 // loop_footer
      %s29 = sadd.s32 1, %s25
    $region7: #{tpu_custom_call.1} parent=1 // loop_footer_branch
      %24 = sbr.rel target = $region3
    $region8: #{tpu_custom_call.1} parent=1 // loop_exit
      _
    %1014 = vsyncpa [#allocation6], 1
    %s1015 = scalar_lea.sflag [#allocation6], 1
    %1016 = vsyncpa %s1015, 1
    %1017 = vsyncpa [#allocation9], 1
    %1018 = vsyncpa [#allocation7], 1
    %s1019 = scalar_lea.sflag [#allocation7], 1
    %1020 = vsyncpa %s1019, 1

</llo_original>
